<compile_context>
chip_gen: v6e
topology: v6e:2x2x1
jax: 0.10.0
libtpu: 0.0.40
codegen_flags: <defaults>
</compile_context>

<pallas_src>
import functools

import jax
import jax.numpy as jnp
from jax import lax
from jax.experimental import pallas as pl
from jax.experimental.pallas import tpu as pltpu


_VMEM = pltpu.MemorySpace.VMEM

# Kernel gate-block order (columns): i, f, o, g  — maps to PyTorch row order i, f, g, o.
_GATE_ORDER = (0, 1, 3, 2)


# ------------------------------- fused whole-model kernel ------------------------------- #
def _fused_lstm_kernel(*refs, T, B, H, num_layers):
    # refs = x, [w_ih, bias, w_hh_blk] * num_layers, fc1_w, fc1_b, fc2_w, fc2_b,
    #        out, pre_scratch, seq_scratch
    idx = 0
    x_ref = refs[idx]; idx += 1
    layer_refs = [(refs[idx + 3 * l], refs[idx + 3 * l + 1], refs[idx + 3 * l + 2])
                  for l in range(num_layers)]
    idx += 3 * num_layers
    fc1w_ref, fc1b_ref, fc2w_ref, fc2b_ref = refs[idx:idx + 4]; idx += 4
    out_ref = refs[idx]; idx += 1
    pre_sc, seq_sc = refs[idx], refs[idx + 1]

    G2, G6, G8 = 2 * H, 6 * H, 8 * H

    # Hoisted fwd/bwd lane mask: fwd half of every 2H-wide gate block.
    lane = lax.broadcasted_iota(jnp.int32, (B, G8), 1)
    fwd_mask = (lane % G2) < H

    def run_layer(wih_ref, b_ref, whh_ref, x_in, is_last):
        # Hoisted input projection: one big (T*B, Din) @ (Din, 8H) bf16 matmul
        # covering every time step of BOTH directions.
        pre = jnp.dot(x_in.astype(jnp.bfloat16), wih_ref[...],
                      preferred_element_type=jnp.float32) + b_ref[...]
        pre_sc[...] = pre.reshape(T, B, G8)

        whh = whh_ref[...]                               # (2H, 8H) bf16, block-diagonal
        h = jnp.zeros((B, G2), jnp.float32)              # [h_f | h_b], h0 = 0
        c = jnp.zeros((B, G2), jnp.float32)              # [c_f | c_b], c0 = 0
        hf_mid = hb_mid = None

        # Fully unrolled serial recurrence (T is small here).
        for t in range(T):
            tb = T - 1 - t                               # backward-direction time index
            # Mix fwd pre-gates from time t with bwd pre-gates from time tb: one wide select.
            p = jnp.where(fwd_mask, pre_sc[t], pre_sc[tb])
            gates = p + jnp.dot(h.astype(jnp.bfloat16), whh,
                                preferred_element_type=jnp.float32)
            sig = jax.nn.sigmoid(gates[:, 0:G6])         # i, f, o for both directions
            g = jnp.tanh(gates[:, G6:G8])                # g for both directions
            i_g, f_g, o_g = sig[:, 0:G2], sig[:, G2:2 * G2], sig[:, 2 * G2:G6]
            c = f_g * c + i_g * g
            h = o_g * jnp.tanh(c)
            if is_last:
                if t == T // 2:                          # out[:, T//2, :H]  (fwd)
                    hf_mid = h[:, 0:H]
                if t == T - 1 - (T // 2):                # out[:, T//2, H:]  (bwd)
                    hb_mid = h[:, H:G2]
            else:
                seq_sc[t, :, 0:H] = h[:, 0:H]            # VMEM-resident layer output
                seq_sc[tb, :, H:G2] = h[:, H:G2]
        return hf_mid, hb_mid

    x_in = x_ref[...]                                    # (T*B, Din)
    hf_mid = hb_mid = None
    for li, (wih, b, whh) in enumerate(layer_refs):
        is_last = li == num_layers - 1
        hf_mid, hb_mid = run_layer(wih, b, whh, x_in, is_last)
        if not is_last:
            x_in = seq_sc[...].reshape(T * B, G2)        # next layer's input, stays in VMEM

    # MLP head, fused: fc -> relu -> fc2 -> sigmoid on out[:, T//2, :].
    mid = jnp.concatenate([hf_mid, hb_mid], axis=1)      # (B, 2H)
    h1 = jnp.dot(mid.astype(jnp.bfloat16), fc1w_ref[...],
                 preferred_element_type=jnp.float32) + fc1b_ref[...]
    h1 = jnp.maximum(h1, 0.0)
    y = jnp.dot(h1.astype(jnp.bfloat16), fc2w_ref[...],
                preferred_element_type=jnp.float32) + fc2b_ref[...]
    out_ref[...] = jax.nn.sigmoid(y)


def lstm_model_forward(x, params):
    """x: (B, T, input_size) -> (B, num_classes).  Single fused pallas_call."""
    B, T, D = x.shape
    H = params["H"]
    num_layers = len(params["layers"])
    C = params["fc2_w_t"].shape[1]

    # One-time transpose to time-major rows for the hoisted input projection.
    x_flat = jnp.transpose(x, (1, 0, 2)).reshape(T * B, D)

    inputs = [x_flat]
    for lyr in params["layers"]:
        inputs += [lyr["w_ih"], lyr["bias"], lyr["w_hh_blk"]]
    inputs += [params["fc_w_t"], params["fc_b"], params["fc2_w_t"], params["fc2_b"]]

    kern = functools.partial(_fused_lstm_kernel, T=T, B=B, H=H, num_layers=num_layers)
    return pl.pallas_call(
        kern,
        out_shape=jax.ShapeDtypeStruct((B, C), jnp.float32),
        in_specs=[pl.BlockSpec(memory_space=_VMEM) for _ in inputs],
        out_specs=pl.BlockSpec(memory_space=_VMEM),
        scratch_shapes=[pltpu.VMEM((T, B, 8 * H), jnp.float32),   # pre-gates
                        pltpu.VMEM((T, B, 2 * H), jnp.float32)],  # inter-layer sequence
        compiler_params=pltpu.CompilerParams(vmem_limit_bytes=32 * 1024 * 1024),
    )(*inputs)


# ------------------------------------ parameters ---------------------------------------- #
def init_params(key, input_size, hidden_size, num_layers, num_classes):
    """'Natural' PyTorch-layout params (rows i,f,g,o; W_hh (4H,H); separate directions)."""
    H = hidden_size
    k_l = 1.0 / jnp.sqrt(jnp.float32(H))

    def uni(k, shape, bound):
        return jax.random.uniform(k, shape, jnp.float32, -bound, bound)

    natural = {"layers": []}
    for layer in range(num_layers):
        d_in = input_size if layer == 0 else 2 * H
        key, *ks = jax.random.split(key, 9)
        natural["layers"].append({
            "w_ih_f": uni(ks[0], (4 * H, d_in), k_l),
            "w_hh_f": uni(ks[1], (4 * H, H), k_l),
            "b_f":    uni(ks[2], (4 * H,), k_l) + uni(ks[3], (4 * H,), k_l),   # b_ih + b_hh
            "w_ih_b": uni(ks[4], (4 * H, d_in), k_l),
            "w_hh_b": uni(ks[5], (4 * H, H), k_l),
            "b_b":    uni(ks[6], (4 * H,), k_l) + uni(ks[7], (4 * H,), k_l),
        })
    key, k1, k2, k3, k4 = jax.random.split(key, 5)
    k_fc = 1.0 / jnp.sqrt(jnp.float32(2 * H))
    k_fc2 = 1.0 / jnp.sqrt(jnp.float32(10))
    natural["fc_w"] = uni(k1, (10, 2 * H), k_fc)
    natural["fc_b"] = uni(k2, (10,), k_fc)
    natural["fc2_w"] = uni(k3, (num_classes, 10), k_fc2)
    natural["fc2_b"] = uni(k4, (num_classes,), k_fc2)
    return natural


def pack_params(natural, H):
    """Repack natural params into the kernel layout: gate blocks [i|f|o|g],
    each block = [fwd H | bwd H]; block-diagonal W_hh of shape (2H, 8H)."""
    layers = []
    for lyr in natural["layers"]:
        wih_cols, bias_cols = [], []
        whh_blk = jnp.zeros((2 * H, 8 * H), jnp.float32)
        for blk, gk in enumerate(_GATE_ORDER):
            rows = slice(gk * H, (gk + 1) * H)
            wih_cols.append(lyr["w_ih_f"][rows].T)
            wih_cols.append(lyr["w_ih_b"][rows].T)
            bias_cols.append(lyr["b_f"][rows])
            bias_cols.append(lyr["b_b"][rows])
            cf = slice(blk * 2 * H, blk * 2 * H + H)
            cb = slice(blk * 2 * H + H, (blk + 1) * 2 * H)
            whh_blk = whh_blk.at[0:H, cf].set(lyr["w_hh_f"][rows].T)
            whh_blk = whh_blk.at[H:2 * H, cb].set(lyr["w_hh_b"][rows].T)
        layers.append({
            "w_ih": jnp.concatenate(wih_cols, axis=1).astype(jnp.bfloat16),  # (Din, 8H)
            "bias": jnp.concatenate(bias_cols)[None, :],                      # (1, 8H) f32
            "w_hh_blk": whh_blk.astype(jnp.bfloat16),                         # (2H, 8H)
        })
    return {
        "layers": layers,
        "H": H,
        "fc_w_t": natural["fc_w"].T.astype(jnp.bfloat16),    # (2H, 10)
        "fc_b": natural["fc_b"][None, :],                    # (1, 10) f32
        "fc2_w_t": natural["fc2_w"].T.astype(jnp.bfloat16),  # (10, C)
        "fc2_b": natural["fc2_b"][None, :],                  # (1, C) f32
    }


# ---------------------------------- pure-JAX reference ----------------------------------- #
def _ref_forward(x, natural, H):
    B, T, D = x.shape

    def bf_dot(a, b):
        return jnp.dot(a.astype(jnp.bfloat16), b.astype(jnp.bfloat16),
                       preferred_element_type=jnp.float32)

    h_seq = x                                              # (B, T, d_in)
    for lyr in natural["layers"]:
        seq_t = jnp.transpose(h_seq, (1, 0, 2))            # (T, B, d_in)

        def run_dir(w_ih, w_hh, b, s):
            pre = (bf_dot(s.reshape(T * B, -1), w_ih.T) + b[None, :]).reshape(T, B, 4 * H)

            def step(carry, p_t):
                hc, cc = carry
                gates = p_t + bf_dot(hc, w_hh.T)
                i, f, g, o = jnp.split(gates, 4, axis=-1)
                cc = jax.nn.sigmoid(f) * cc + jax.nn.sigmoid(i) * jnp.tanh(g)
                hc = jax.nn.sigmoid(o) * jnp.tanh(cc)
                return (hc, cc), hc

            z = jnp.zeros((B, H), jnp.float32)
            _, hs = lax.scan(step, (z, z), pre)
            return hs

        hs_f = run_dir(lyr["w_ih_f"], lyr["w_hh_f"], lyr["b_f"], seq_t)
        hs_b = run_dir(lyr["w_ih_b"], lyr["w_hh_b"], lyr["b_b"], seq_t[::-1])[::-1]
        h_seq = jnp.transpose(jnp.concatenate([hs_f, hs_b], axis=-1), (1, 0, 2))

    mid = h_seq[:, T // 2, :]
    h1 = jnp.maximum(bf_dot(mid, natural["fc_w"].T) + natural["fc_b"][None, :], 0.0)
    return jax.nn.sigmoid(bf_dot(h1, natural["fc2_w"].T) + natural["fc2_b"][None, :])


# ------------------------------------------ main ----------------------------------------- #
if __name__ == "__main__":
    B, T = 2, 8
    input_size, hidden_size, num_layers, num_classes = 16, 32, 2, 4

    key = jax.random.PRNGKey(0)
    pkey, xkey = jax.random.split(key)
    natural = init_params(pkey, input_size, hidden_size, num_layers, num_classes)
    params = pack_params(natural, hidden_size)
    x = jax.random.normal(xkey, (B, T, input_size), jnp.float32)

    out = jax.block_until_ready(lstm_model_forward(x, params))
    assert out.shape == (B, num_classes)

    ref = _ref_forward(x, natural, hidden_size)
    assert jnp.allclose(out, ref, atol=2e-3, rtol=2e-3), "mismatch vs JAX reference"

    print("KERNEL_OK")
</pallas_src>

<mosaic_0001>
module attributes {stable_mosaic.version = 11 : i64} {
  func.func @_fused_lstm_kernel(%arg0: memref<16x16xf32, #tpu.memory_space<vmem>>, %arg1: memref<16x256xbf16, #tpu.memory_space<vmem>>, %arg2: memref<1x256xf32, #tpu.memory_space<vmem>>, %arg3: memref<64x256xbf16, #tpu.memory_space<vmem>>, %arg4: memref<64x256xbf16, #tpu.memory_space<vmem>>, %arg5: memref<1x256xf32, #tpu.memory_space<vmem>>, %arg6: memref<64x256xbf16, #tpu.memory_space<vmem>>, %arg7: memref<64x10xbf16, #tpu.memory_space<vmem>>, %arg8: memref<1x10xf32, #tpu.memory_space<vmem>>, %arg9: memref<10x4xbf16, #tpu.memory_space<vmem>>, %arg10: memref<1x4xf32, #tpu.memory_space<vmem>>, %arg11: memref<2x4xf32, #tpu.memory_space<vmem>>, %arg12: memref<8x2x256xf32, #tpu.memory_space<vmem>>, %arg13: memref<8x2x64xf32, #tpu.memory_space<vmem>>) attributes {dimension_semantics = [], scalar_prefetch = 0 : i64, scratch_operands = 2 : i64, tpu.core_type = #tpu.core_type<tc>} {
    %0 = tpu.iota {dimensions = array<i32: 1>} : vector<2x256xi32>
    %c64_i32 = arith.constant 64 : i32
    %c0_i32 = arith.constant 0 : i32
    %1 = arith.cmpi eq, %c64_i32, %c0_i32 : i32
    %c1_i32 = arith.constant 1 : i32
    %2 = arith.select %1, %c1_i32, %c64_i32 : i32
    %3 = vector.broadcast %2 : i32 to vector<2x256xi32>
    %4 = arith.remsi %0, %3 : vector<2x256xi32>
    %c0_i32_0 = arith.constant 0 : i32
    %5 = vector.broadcast %c0_i32_0 : i32 to vector<2x256xi32>
    %6 = arith.cmpi ne, %4, %5 : vector<2x256xi32>
    %c0_i32_1 = arith.constant 0 : i32
    %7 = vector.broadcast %c0_i32_1 : i32 to vector<2x256xi32>
    %8 = arith.cmpi slt, %4, %7 : vector<2x256xi32>
    %c0_i32_2 = arith.constant 0 : i32
    %9 = arith.cmpi slt, %2, %c0_i32_2 : i32
    %10 = vector.broadcast %9 : i1 to vector<2x256xi1>
    %11 = vector.broadcast %10 : vector<2x256xi1> to vector<2x256xi1>
    %12 = arith.xori %8, %11 : vector<2x256xi1>
    %13 = arith.andi %12, %6 : vector<2x256xi1>
    %14 = vector.broadcast %2 : i32 to vector<2x256xi32>
    %15 = arith.addi %4, %14 : vector<2x256xi32>
    %16 = arith.select %13, %15, %4 : vector<2x256xi1>, vector<2x256xi32>
    %c32_i32 = arith.constant 32 : i32
    %17 = vector.broadcast %c32_i32 : i32 to vector<2x256xi32>
    %18 = arith.cmpi slt, %16, %17 : vector<2x256xi32>
    %c0 = arith.constant 0 : index
    %c0_3 = arith.constant 0 : index
    %19 = vector.load %arg0[%c0, %c0_3] : memref<16x16xf32, #tpu.memory_space<vmem>>, vector<16x16xf32>
    %20 = arith.truncf %19 : vector<16x16xf32> to vector<16x16xbf16>
    %c0_4 = arith.constant 0 : index
    %c0_5 = arith.constant 0 : index
    %21 = vector.load %arg1[%c0_4, %c0_5] : memref<16x256xbf16, #tpu.memory_space<vmem>>, vector<16x256xbf16>
    %cst = arith.constant dense<0.000000e+00> : vector<16x256xf32>
    %22 = tpu.matmul %20, %21, %cst {dimension_numbers = #tpu.dot_dimension_numbers<[1], [0], [0], [1], [0, 0, 1, 1], [], []>} : vector<16x16xbf16>, vector<16x256xbf16>, vector<16x256xf32> -> vector<16x256xf32>
    %c0_6 = arith.constant 0 : index
    %c0_7 = arith.constant 0 : index
    %23 = vector.load %arg2[%c0_6, %c0_7] : memref<1x256xf32, #tpu.memory_space<vmem>>, vector<1x256xf32>
    %24 = vector.broadcast %23 : vector<1x256xf32> to vector<16x256xf32>
    %25 = arith.addf %22, %24 : vector<16x256xf32>
    %26 = vector.shape_cast %25 : vector<16x256xf32> to vector<8x2x256xf32>
    %c0_8 = arith.constant 0 : index
    %c0_9 = arith.constant 0 : index
    %c0_10 = arith.constant 0 : index
    %27 = vector.load %arg12[%c0_8, %c0_9, %c0_10] : memref<8x2x256xf32, #tpu.memory_space<vmem>>, vector<8x2x256xf32>
    tpu.vector_store %arg12[%c0_8, %c0_9, %c0_10], %26 {strides = array<i32>} : memref<8x2x256xf32, #tpu.memory_space<vmem>>, vector<8x2x256xf32>,
    %c0_11 = arith.constant 0 : index
    %c0_12 = arith.constant 0 : index
    %28 = vector.load %arg3[%c0_11, %c0_12] : memref<64x256xbf16, #tpu.memory_space<vmem>>, vector<64x256xbf16>
    %cst_13 = arith.constant 0.000000e+00 : f32
    %29 = vector.broadcast %cst_13 : f32 to vector<2x64xf32>
    %cst_14 = arith.constant 0.000000e+00 : f32
    %30 = vector.broadcast %cst_14 : f32 to vector<2x64xf32>
    %c0_15 = arith.constant 0 : index
    %c0_16 = arith.constant 0 : index
    %c0_17 = arith.constant 0 : index
    %31 = vector.load %arg12[%c0_15, %c0_16, %c0_17] : memref<8x2x256xf32, #tpu.memory_space<vmem>>, vector<1x2x256xf32>
    %32 = vector.shape_cast %31 : vector<1x2x256xf32> to vector<2x256xf32>
    %c7 = arith.constant 7 : index
    %c0_18 = arith.constant 0 : index
    %c0_19 = arith.constant 0 : index
    %33 = vector.load %arg12[%c7, %c0_18, %c0_19] : memref<8x2x256xf32, #tpu.memory_space<vmem>>, vector<1x2x256xf32>
    %34 = vector.shape_cast %33 : vector<1x2x256xf32> to vector<2x256xf32>
    %35 = arith.select %18, %32, %34 : vector<2x256xi1>, vector<2x256xf32>
    %36 = arith.truncf %29 : vector<2x64xf32> to vector<2x64xbf16>
    %cst_20 = arith.constant dense<0.000000e+00> : vector<2x256xf32>
    %37 = tpu.matmul %36, %28, %cst_20 {dimension_numbers = #tpu.dot_dimension_numbers<[1], [0], [0], [1], [0, 0, 1, 1], [], []>} : vector<2x64xbf16>, vector<64x256xbf16>, vector<2x256xf32> -> vector<2x256xf32>
    %38 = arith.addf %35, %37 : vector<2x256xf32>
    %39 = vector.extract_strided_slice %38 {offsets = [0, 0], sizes = [2, 192], strides = [1, 1]} : vector<2x256xf32> to vector<2x192xf32>
    %40 = arith.negf %39 : vector<2x192xf32>
    %41 = math.exp %40 : vector<2x192xf32>
    %cst_21 = arith.constant 1.000000e+00 : f32
    %42 = vector.broadcast %cst_21 : f32 to vector<2x192xf32>
    %43 = arith.addf %42, %41 : vector<2x192xf32>
    %44 = arith.divf %42, %43 : vector<2x192xf32>
    %45 = vector.extract_strided_slice %38 {offsets = [0, 192], sizes = [2, 64], strides = [1, 1]} : vector<2x256xf32> to vector<2x64xf32>
    %46 = math.tanh %45 : vector<2x64xf32>
    %47 = vector.extract_strided_slice %44 {offsets = [0, 0], sizes = [2, 64], strides = [1, 1]} : vector<2x192xf32> to vector<2x64xf32>
    %48 = vector.extract_strided_slice %44 {offsets = [0, 64], sizes = [2, 64], strides = [1, 1]} : vector<2x192xf32> to vector<2x64xf32>
    %49 = vector.extract_strided_slice %44 {offsets = [0, 128], sizes = [2, 64], strides = [1, 1]} : vector<2x192xf32> to vector<2x64xf32>
    %50 = arith.mulf %48, %30 : vector<2x64xf32>
    %51 = arith.mulf %47, %46 : vector<2x64xf32>
    %52 = arith.addf %50, %51 : vector<2x64xf32>
    %53 = math.tanh %52 : vector<2x64xf32>
    %54 = arith.mulf %49, %53 : vector<2x64xf32>
    %55 = vector.extract_strided_slice %54 {offsets = [0, 0], sizes = [2, 32], strides = [1, 1]} : vector<2x64xf32> to vector<2x32xf32>
    %c0_22 = arith.constant 0 : index
    %c0_23 = arith.constant 0 : index
    %c0_24 = arith.constant 0 : index
    %56 = vector.load %arg13[%c0_22, %c0_23, %c0_24] : memref<8x2x64xf32, #tpu.memory_space<vmem>>, vector<1x2x32xf32>
    %57 = vector.shape_cast %56 : vector<1x2x32xf32> to vector<2x32xf32>
    %58 = vector.shape_cast %55 : vector<2x32xf32> to vector<1x2x32xf32>
    tpu.vector_store %arg13[%c0_22, %c0_23, %c0_24], %58 {strides = array<i32>} : memref<8x2x64xf32, #tpu.memory_space<vmem>>, vector<1x2x32xf32>,
    %59 = vector.extract_strided_slice %54 {offsets = [0, 32], sizes = [2, 32], strides = [1, 1]} : vector<2x64xf32> to vector<2x32xf32>
    %c7_25 = arith.constant 7 : index
    %c0_26 = arith.constant 0 : index
    %c32 = arith.constant 32 : index
    %60 = vector.load %arg13[%c7_25, %c0_26, %c32] : memref<8x2x64xf32, #tpu.memory_space<vmem>>, vector<1x2x32xf32>
    %61 = vector.shape_cast %60 : vector<1x2x32xf32> to vector<2x32xf32>
    %62 = vector.shape_cast %59 : vector<2x32xf32> to vector<1x2x32xf32>
    tpu.vector_store %arg13[%c7_25, %c0_26, %c32], %62 {strides = array<i32>} : memref<8x2x64xf32, #tpu.memory_space<vmem>>, vector<1x2x32xf32>,
    %c1 = arith.constant 1 : index
    %c0_27 = arith.constant 0 : index
    %c0_28 = arith.constant 0 : index
    %63 = vector.load %arg12[%c1, %c0_27, %c0_28] : memref<8x2x256xf32, #tpu.memory_space<vmem>>, vector<1x2x256xf32>
    %64 = vector.shape_cast %63 : vector<1x2x256xf32> to vector<2x256xf32>
    %c6 = arith.constant 6 : index
    %c0_29 = arith.constant 0 : index
    %c0_30 = arith.constant 0 : index
    %65 = vector.load %arg12[%c6, %c0_29, %c0_30] : memref<8x2x256xf32, #tpu.memory_space<vmem>>, vector<1x2x256xf32>
    %66 = vector.shape_cast %65 : vector<1x2x256xf32> to vector<2x256xf32>
    %67 = arith.select %18, %64, %66 : vector<2x256xi1>, vector<2x256xf32>
    %68 = arith.truncf %54 : vector<2x64xf32> to vector<2x64xbf16>
    %cst_31 = arith.constant dense<0.000000e+00> : vector<2x256xf32>
    %69 = tpu.matmul %68, %28, %cst_31 {dimension_numbers = #tpu.dot_dimension_numbers<[1], [0], [0], [1], [0, 0, 1, 1], [], []>} : vector<2x64xbf16>, vector<64x256xbf16>, vector<2x256xf32> -> vector<2x256xf32>
    %70 = arith.addf %67, %69 : vector<2x256xf32>
    %71 = vector.extract_strided_slice %70 {offsets = [0, 0], sizes = [2, 192], strides = [1, 1]} : vector<2x256xf32> to vector<2x192xf32>
    %72 = arith.negf %71 : vector<2x192xf32>
    %73 = math.exp %72 : vector<2x192xf32>
    %cst_32 = arith.constant 1.000000e+00 : f32
    %74 = vector.broadcast %cst_32 : f32 to vector<2x192xf32>
    %75 = arith.addf %74, %73 : vector<2x192xf32>
    %76 = arith.divf %74, %75 : vector<2x192xf32>
    %77 = vector.extract_strided_slice %70 {offsets = [0, 192], sizes = [2, 64], strides = [1, 1]} : vector<2x256xf32> to vector<2x64xf32>
    %78 = math.tanh %77 : vector<2x64xf32>
    %79 = vector.extract_strided_slice %76 {offsets = [0, 0], sizes = [2, 64], strides = [1, 1]} : vector<2x192xf32> to vector<2x64xf32>
    %80 = vector.extract_strided_slice %76 {offsets = [0, 64], sizes = [2, 64], strides = [1, 1]} : vector<2x192xf32> to vector<2x64xf32>
    %81 = vector.extract_strided_slice %76 {offsets = [0, 128], sizes = [2, 64], strides = [1, 1]} : vector<2x192xf32> to vector<2x64xf32>
    %82 = arith.mulf %80, %52 : vector<2x64xf32>
    %83 = arith.mulf %79, %78 : vector<2x64xf32>
    %84 = arith.addf %82, %83 : vector<2x64xf32>
    %85 = math.tanh %84 : vector<2x64xf32>
    %86 = arith.mulf %81, %85 : vector<2x64xf32>
    %87 = vector.extract_strided_slice %86 {offsets = [0, 0], sizes = [2, 32], strides = [1, 1]} : vector<2x64xf32> to vector<2x32xf32>
    %c1_33 = arith.constant 1 : index
    %c0_34 = arith.constant 0 : index
    %c0_35 = arith.constant 0 : index
    %88 = vector.load %arg13[%c1_33, %c0_34, %c0_35] : memref<8x2x64xf32, #tpu.memory_space<vmem>>, vector<1x2x32xf32>
    %89 = vector.shape_cast %88 : vector<1x2x32xf32> to vector<2x32xf32>
    %90 = vector.shape_cast %87 : vector<2x32xf32> to vector<1x2x32xf32>
    tpu.vector_store %arg13[%c1_33, %c0_34, %c0_35], %90 {strides = array<i32>} : memref<8x2x64xf32, #tpu.memory_space<vmem>>, vector<1x2x32xf32>,
    %91 = vector.extract_strided_slice %86 {offsets = [0, 32], sizes = [2, 32], strides = [1, 1]} : vector<2x64xf32> to vector<2x32xf32>
    %c6_36 = arith.constant 6 : index
    %c0_37 = arith.constant 0 : index
    %c32_38 = arith.constant 32 : index
    %92 = vector.load %arg13[%c6_36, %c0_37, %c32_38] : memref<8x2x64xf32, #tpu.memory_space<vmem>>, vector<1x2x32xf32>
    %93 = vector.shape_cast %92 : vector<1x2x32xf32> to vector<2x32xf32>
    %94 = vector.shape_cast %91 : vector<2x32xf32> to vector<1x2x32xf32>
    tpu.vector_store %arg13[%c6_36, %c0_37, %c32_38], %94 {strides = array<i32>} : memref<8x2x64xf32, #tpu.memory_space<vmem>>, vector<1x2x32xf32>,
    %c2 = arith.constant 2 : index
    %c0_39 = arith.constant 0 : index
    %c0_40 = arith.constant 0 : index
    %95 = vector.load %arg12[%c2, %c0_39, %c0_40] : memref<8x2x256xf32, #tpu.memory_space<vmem>>, vector<1x2x256xf32>
    %96 = vector.shape_cast %95 : vector<1x2x256xf32> to vector<2x256xf32>
    %c5 = arith.constant 5 : index
    %c0_41 = arith.constant 0 : index
    %c0_42 = arith.constant 0 : index
    %97 = vector.load %arg12[%c5, %c0_41, %c0_42] : memref<8x2x256xf32, #tpu.memory_space<vmem>>, vector<1x2x256xf32>
    %98 = vector.shape_cast %97 : vector<1x2x256xf32> to vector<2x256xf32>
    %99 = arith.select %18, %96, %98 : vector<2x256xi1>, vector<2x256xf32>
    %100 = arith.truncf %86 : vector<2x64xf32> to vector<2x64xbf16>
    %cst_43 = arith.constant dense<0.000000e+00> : vector<2x256xf32>
    %101 = tpu.matmul %100, %28, %cst_43 {dimension_numbers = #tpu.dot_dimension_numbers<[1], [0], [0], [1], [0, 0, 1, 1], [], []>} : vector<2x64xbf16>, vector<64x256xbf16>, vector<2x256xf32> -> vector<2x256xf32>
    %102 = arith.addf %99, %101 : vector<2x256xf32>
    %103 = vector.extract_strided_slice %102 {offsets = [0, 0], sizes = [2, 192], strides = [1, 1]} : vector<2x256xf32> to vector<2x192xf32>
    %104 = arith.negf %103 : vector<2x192xf32>
    %105 = math.exp %104 : vector<2x192xf32>
    %cst_44 = arith.constant 1.000000e+00 : f32
    %106 = vector.broadcast %cst_44 : f32 to vector<2x192xf32>
    %107 = arith.addf %106, %105 : vector<2x192xf32>
    %108 = arith.divf %106, %107 : vector<2x192xf32>
    %109 = vector.extract_strided_slice %102 {offsets = [0, 192], sizes = [2, 64], strides = [1, 1]} : vector<2x256xf32> to vector<2x64xf32>
    %110 = math.tanh %109 : vector<2x64xf32>
    %111 = vector.extract_strided_slice %108 {offsets = [0, 0], sizes = [2, 64], strides = [1, 1]} : vector<2x192xf32> to vector<2x64xf32>
    %112 = vector.extract_strided_slice %108 {offsets = [0, 64], sizes = [2, 64], strides = [1, 1]} : vector<2x192xf32> to vector<2x64xf32>
    %113 = vector.extract_strided_slice %108 {offsets = [0, 128], sizes = [2, 64], strides = [1, 1]} : vector<2x192xf32> to vector<2x64xf32>
    %114 = arith.mulf %112, %84 : vector<2x64xf32>
    %115 = arith.mulf %111, %110 : vector<2x64xf32>
    %116 = arith.addf %114, %115 : vector<2x64xf32>
    %117 = math.tanh %116 : vector<2x64xf32>
    %118 = arith.mulf %113, %117 : vector<2x64xf32>
    %119 = vector.extract_strided_slice %118 {offsets = [0, 0], sizes = [2, 32], strides = [1, 1]} : vector<2x64xf32> to vector<2x32xf32>
    %c2_45 = arith.constant 2 : index
    %c0_46 = arith.constant 0 : index
    %c0_47 = arith.constant 0 : index
    %120 = vector.load %arg13[%c2_45, %c0_46, %c0_47] : memref<8x2x64xf32, #tpu.memory_space<vmem>>, vector<1x2x32xf32>
    %121 = vector.shape_cast %120 : vector<1x2x32xf32> to vector<2x32xf32>
    %122 = vector.shape_cast %119 : vector<2x32xf32> to vector<1x2x32xf32>
    tpu.vector_store %arg13[%c2_45, %c0_46, %c0_47], %122 {strides = array<i32>} : memref<8x2x64xf32, #tpu.memory_space<vmem>>, vector<1x2x32xf32>,
    %123 = vector.extract_strided_slice %118 {offsets = [0, 32], sizes = [2, 32], strides = [1, 1]} : vector<2x64xf32> to vector<2x32xf32>
    %c5_48 = arith.constant 5 : index
    %c0_49 = arith.constant 0 : index
    %c32_50 = arith.constant 32 : index
    %124 = vector.load %arg13[%c5_48, %c0_49, %c32_50] : memref<8x2x64xf32, #tpu.memory_space<vmem>>, vector<1x2x32xf32>
    %125 = vector.shape_cast %124 : vector<1x2x32xf32> to vector<2x32xf32>
    %126 = vector.shape_cast %123 : vector<2x32xf32> to vector<1x2x32xf32>
    tpu.vector_store %arg13[%c5_48, %c0_49, %c32_50], %126 {strides = array<i32>} : memref<8x2x64xf32, #tpu.memory_space<vmem>>, vector<1x2x32xf32>,
    %c3 = arith.constant 3 : index
    %c0_51 = arith.constant 0 : index
    %c0_52 = arith.constant 0 : index
    %127 = vector.load %arg12[%c3, %c0_51, %c0_52] : memref<8x2x256xf32, #tpu.memory_space<vmem>>, vector<1x2x256xf32>
    %128 = vector.shape_cast %127 : vector<1x2x256xf32> to vector<2x256xf32>
    %c4 = arith.constant 4 : index
    %c0_53 = arith.constant 0 : index
    %c0_54 = arith.constant 0 : index
    %129 = vector.load %arg12[%c4, %c0_53, %c0_54] : memref<8x2x256xf32, #tpu.memory_space<vmem>>, vector<1x2x256xf32>
    %130 = vector.shape_cast %129 : vector<1x2x256xf32> to vector<2x256xf32>
    %131 = arith.select %18, %128, %130 : vector<2x256xi1>, vector<2x256xf32>
    %132 = arith.truncf %118 : vector<2x64xf32> to vector<2x64xbf16>
    %cst_55 = arith.constant dense<0.000000e+00> : vector<2x256xf32>
    %133 = tpu.matmul %132, %28, %cst_55 {dimension_numbers = #tpu.dot_dimension_numbers<[1], [0], [0], [1], [0, 0, 1, 1], [], []>} : vector<2x64xbf16>, vector<64x256xbf16>, vector<2x256xf32> -> vector<2x256xf32>
    %134 = arith.addf %131, %133 : vector<2x256xf32>
    %135 = vector.extract_strided_slice %134 {offsets = [0, 0], sizes = [2, 192], strides = [1, 1]} : vector<2x256xf32> to vector<2x192xf32>
    %136 = arith.negf %135 : vector<2x192xf32>
    %137 = math.exp %136 : vector<2x192xf32>
    %cst_56 = arith.constant 1.000000e+00 : f32
    %138 = vector.broadcast %cst_56 : f32 to vector<2x192xf32>
    %139 = arith.addf %138, %137 : vector<2x192xf32>
    %140 = arith.divf %138, %139 : vector<2x192xf32>
    %141 = vector.extract_strided_slice %134 {offsets = [0, 192], sizes = [2, 64], strides = [1, 1]} : vector<2x256xf32> to vector<2x64xf32>
    %142 = math.tanh %141 : vector<2x64xf32>
    %143 = vector.extract_strided_slice %140 {offsets = [0, 0], sizes = [2, 64], strides = [1, 1]} : vector<2x192xf32> to vector<2x64xf32>
    %144 = vector.extract_strided_slice %140 {offsets = [0, 64], sizes = [2, 64], strides = [1, 1]} : vector<2x192xf32> to vector<2x64xf32>
    %145 = vector.extract_strided_slice %140 {offsets = [0, 128], sizes = [2, 64], strides = [1, 1]} : vector<2x192xf32> to vector<2x64xf32>
    %146 = arith.mulf %144, %116 : vector<2x64xf32>
    %147 = arith.mulf %143, %142 : vector<2x64xf32>
    %148 = arith.addf %146, %147 : vector<2x64xf32>
    %149 = math.tanh %148 : vector<2x64xf32>
    %150 = arith.mulf %145, %149 : vector<2x64xf32>
    %151 = vector.extract_strided_slice %150 {offsets = [0, 0], sizes = [2, 32], strides = [1, 1]} : vector<2x64xf32> to vector<2x32xf32>
    %c3_57 = arith.constant 3 : index
    %c0_58 = arith.constant 0 : index
    %c0_59 = arith.constant 0 : index
    %152 = vector.load %arg13[%c3_57, %c0_58, %c0_59] : memref<8x2x64xf32, #tpu.memory_space<vmem>>, vector<1x2x32xf32>
    %153 = vector.shape_cast %152 : vector<1x2x32xf32> to vector<2x32xf32>
    %154 = vector.shape_cast %151 : vector<2x32xf32> to vector<1x2x32xf32>
    tpu.vector_store %arg13[%c3_57, %c0_58, %c0_59], %154 {strides = array<i32>} : memref<8x2x64xf32, #tpu.memory_space<vmem>>, vector<1x2x32xf32>,
    %155 = vector.extract_strided_slice %150 {offsets = [0, 32], sizes = [2, 32], strides = [1, 1]} : vector<2x64xf32> to vector<2x32xf32>
    %c4_60 = arith.constant 4 : index
    %c0_61 = arith.constant 0 : index
    %c32_62 = arith.constant 32 : index
    %156 = vector.load %arg13[%c4_60, %c0_61, %c32_62] : memref<8x2x64xf32, #tpu.memory_space<vmem>>, vector<1x2x32xf32>
    %157 = vector.shape_cast %156 : vector<1x2x32xf32> to vector<2x32xf32>
    %158 = vector.shape_cast %155 : vector<2x32xf32> to vector<1x2x32xf32>
    tpu.vector_store %arg13[%c4_60, %c0_61, %c32_62], %158 {strides = array<i32>} : memref<8x2x64xf32, #tpu.memory_space<vmem>>, vector<1x2x32xf32>,
    %c4_63 = arith.constant 4 : index
    %c0_64 = arith.constant 0 : index
    %c0_65 = arith.constant 0 : index
    %159 = vector.load %arg12[%c4_63, %c0_64, %c0_65] : memref<8x2x256xf32, #tpu.memory_space<vmem>>, vector<1x2x256xf32>
    %160 = vector.shape_cast %159 : vector<1x2x256xf32> to vector<2x256xf32>
    %c3_66 = arith.constant 3 : index
    %c0_67 = arith.constant 0 : index
    %c0_68 = arith.constant 0 : index
    %161 = vector.load %arg12[%c3_66, %c0_67, %c0_68] : memref<8x2x256xf32, #tpu.memory_space<vmem>>, vector<1x2x256xf32>
    %162 = vector.shape_cast %161 : vector<1x2x256xf32> to vector<2x256xf32>
    %163 = arith.select %18, %160, %162 : vector<2x256xi1>, vector<2x256xf32>
    %164 = arith.truncf %150 : vector<2x64xf32> to vector<2x64xbf16>
    %cst_69 = arith.constant dense<0.000000e+00> : vector<2x256xf32>
    %165 = tpu.matmul %164, %28, %cst_69 {dimension_numbers = #tpu.dot_dimension_numbers<[1], [0], [0], [1], [0, 0, 1, 1], [], []>} : vector<2x64xbf16>, vector<64x256xbf16>, vector<2x256xf32> -> vector<2x256xf32>
    %166 = arith.addf %163, %165 : vector<2x256xf32>
    %167 = vector.extract_strided_slice %166 {offsets = [0, 0], sizes = [2, 192], strides = [1, 1]} : vector<2x256xf32> to vector<2x192xf32>
    %168 = arith.negf %167 : vector<2x192xf32>
    %169 = math.exp %168 : vector<2x192xf32>
    %cst_70 = arith.constant 1.000000e+00 : f32
    %170 = vector.broadcast %cst_70 : f32 to vector<2x192xf32>
    %171 = arith.addf %170, %169 : vector<2x192xf32>
    %172 = arith.divf %170, %171 : vector<2x192xf32>
    %173 = vector.extract_strided_slice %166 {offsets = [0, 192], sizes = [2, 64], strides = [1, 1]} : vector<2x256xf32> to vector<2x64xf32>
    %174 = math.tanh %173 : vector<2x64xf32>
    %175 = vector.extract_strided_slice %172 {offsets = [0, 0], sizes = [2, 64], strides = [1, 1]} : vector<2x192xf32> to vector<2x64xf32>
    %176 = vector.extract_strided_slice %172 {offsets = [0, 64], sizes = [2, 64], strides = [1, 1]} : vector<2x192xf32> to vector<2x64xf32>
    %177 = vector.extract_strided_slice %172 {offsets = [0, 128], sizes = [2, 64], strides = [1, 1]} : vector<2x192xf32> to vector<2x64xf32>
    %178 = arith.mulf %176, %148 : vector<2x64xf32>
    %179 = arith.mulf %175, %174 : vector<2x64xf32>
    %180 = arith.addf %178, %179 : vector<2x64xf32>
    %181 = math.tanh %180 : vector<2x64xf32>
    %182 = arith.mulf %177, %181 : vector<2x64xf32>
    %183 = vector.extract_strided_slice %182 {offsets = [0, 0], sizes = [2, 32], strides = [1, 1]} : vector<2x64xf32> to vector<2x32xf32>
    %c4_71 = arith.constant 4 : index
    %c0_72 = arith.constant 0 : index
    %c0_73 = arith.constant 0 : index
    %184 = vector.load %arg13[%c4_71, %c0_72, %c0_73] : memref<8x2x64xf32, #tpu.memory_space<vmem>>, vector<1x2x32xf32>
    %185 = vector.shape_cast %184 : vector<1x2x32xf32> to vector<2x32xf32>
    %186 = vector.shape_cast %183 : vector<2x32xf32> to vector<1x2x32xf32>
    tpu.vector_store %arg13[%c4_71, %c0_72, %c0_73], %186 {strides = array<i32>} : memref<8x2x64xf32, #tpu.memory_space<vmem>>, vector<1x2x32xf32>,
    %187 = vector.extract_strided_slice %182 {offsets = [0, 32], sizes = [2, 32], strides = [1, 1]} : vector<2x64xf32> to vector<2x32xf32>
    %c3_74 = arith.constant 3 : index
    %c0_75 = arith.constant 0 : index
    %c32_76 = arith.constant 32 : index
    %188 = vector.load %arg13[%c3_74, %c0_75, %c32_76] : memref<8x2x64xf32, #tpu.memory_space<vmem>>, vector<1x2x32xf32>
    %189 = vector.shape_cast %188 : vector<1x2x32xf32> to vector<2x32xf32>
    %190 = vector.shape_cast %187 : vector<2x32xf32> to vector<1x2x32xf32>
    tpu.vector_store %arg13[%c3_74, %c0_75, %c32_76], %190 {strides = array<i32>} : memref<8x2x64xf32, #tpu.memory_space<vmem>>, vector<1x2x32xf32>,
    %c5_77 = arith.constant 5 : index
    %c0_78 = arith.constant 0 : index
    %c0_79 = arith.constant 0 : index
    %191 = vector.load %arg12[%c5_77, %c0_78, %c0_79] : memref<8x2x256xf32, #tpu.memory_space<vmem>>, vector<1x2x256xf32>
    %192 = vector.shape_cast %191 : vector<1x2x256xf32> to vector<2x256xf32>
    %c2_80 = arith.constant 2 : index
    %c0_81 = arith.constant 0 : index
    %c0_82 = arith.constant 0 : index
    %193 = vector.load %arg12[%c2_80, %c0_81, %c0_82] : memref<8x2x256xf32, #tpu.memory_space<vmem>>, vector<1x2x256xf32>
    %194 = vector.shape_cast %193 : vector<1x2x256xf32> to vector<2x256xf32>
    %195 = arith.select %18, %192, %194 : vector<2x256xi1>, vector<2x256xf32>
    %196 = arith.truncf %182 : vector<2x64xf32> to vector<2x64xbf16>
    %cst_83 = arith.constant dense<0.000000e+00> : vector<2x256xf32>
    %197 = tpu.matmul %196, %28, %cst_83 {dimension_numbers = #tpu.dot_dimension_numbers<[1], [0], [0], [1], [0, 0, 1, 1], [], []>} : vector<2x64xbf16>, vector<64x256xbf16>, vector<2x256xf32> -> vector<2x256xf32>
    %198 = arith.addf %195, %197 : vector<2x256xf32>
    %199 = vector.extract_strided_slice %198 {offsets = [0, 0], sizes = [2, 192], strides = [1, 1]} : vector<2x256xf32> to vector<2x192xf32>
    %200 = arith.negf %199 : vector<2x192xf32>
    %201 = math.exp %200 : vector<2x192xf32>
    %cst_84 = arith.constant 1.000000e+00 : f32
    %202 = vector.broadcast %cst_84 : f32 to vector<2x192xf32>
    %203 = arith.addf %202, %201 : vector<2x192xf32>
    %204 = arith.divf %202, %203 : vector<2x192xf32>
    %205 = vector.extract_strided_slice %198 {offsets = [0, 192], sizes = [2, 64], strides = [1, 1]} : vector<2x256xf32> to vector<2x64xf32>
    %206 = math.tanh %205 : vector<2x64xf32>
    %207 = vector.extract_strided_slice %204 {offsets = [0, 0], sizes = [2, 64], strides = [1, 1]} : vector<2x192xf32> to vector<2x64xf32>
    %208 = vector.extract_strided_slice %204 {offsets = [0, 64], sizes = [2, 64], strides = [1, 1]} : vector<2x192xf32> to vector<2x64xf32>
    %209 = vector.extract_strided_slice %204 {offsets = [0, 128], sizes = [2, 64], strides = [1, 1]} : vector<2x192xf32> to vector<2x64xf32>
    %210 = arith.mulf %208, %180 : vector<2x64xf32>
    %211 = arith.mulf %207, %206 : vector<2x64xf32>
    %212 = arith.addf %210, %211 : vector<2x64xf32>
    %213 = math.tanh %212 : vector<2x64xf32>
    %214 = arith.mulf %209, %213 : vector<2x64xf32>
    %215 = vector.extract_strided_slice %214 {offsets = [0, 0], sizes = [2, 32], strides = [1, 1]} : vector<2x64xf32> to vector<2x32xf32>
    %c5_85 = arith.constant 5 : index
    %c0_86 = arith.constant 0 : index
    %c0_87 = arith.constant 0 : index
    %216 = vector.load %arg13[%c5_85, %c0_86, %c0_87] : memref<8x2x64xf32, #tpu.memory_space<vmem>>, vector<1x2x32xf32>
    %217 = vector.shape_cast %216 : vector<1x2x32xf32> to vector<2x32xf32>
    %218 = vector.shape_cast %215 : vector<2x32xf32> to vector<1x2x32xf32>
    tpu.vector_store %arg13[%c5_85, %c0_86, %c0_87], %218 {strides = array<i32>} : memref<8x2x64xf32, #tpu.memory_space<vmem>>, vector<1x2x32xf32>,
    %219 = vector.extract_strided_slice %214 {offsets = [0, 32], sizes = [2, 32], strides = [1, 1]} : vector<2x64xf32> to vector<2x32xf32>
    %c2_88 = arith.constant 2 : index
    %c0_89 = arith.constant 0 : index
    %c32_90 = arith.constant 32 : index
    %220 = vector.load %arg13[%c2_88, %c0_89, %c32_90] : memref<8x2x64xf32, #tpu.memory_space<vmem>>, vector<1x2x32xf32>
    %221 = vector.shape_cast %220 : vector<1x2x32xf32> to vector<2x32xf32>
    %222 = vector.shape_cast %219 : vector<2x32xf32> to vector<1x2x32xf32>
    tpu.vector_store %arg13[%c2_88, %c0_89, %c32_90], %222 {strides = array<i32>} : memref<8x2x64xf32, #tpu.memory_space<vmem>>, vector<1x2x32xf32>,
    %c6_91 = arith.constant 6 : index
    %c0_92 = arith.constant 0 : index
    %c0_93 = arith.constant 0 : index
    %223 = vector.load %arg12[%c6_91, %c0_92, %c0_93] : memref<8x2x256xf32, #tpu.memory_space<vmem>>, vector<1x2x256xf32>
    %224 = vector.shape_cast %223 : vector<1x2x256xf32> to vector<2x256xf32>
    %c1_94 = arith.constant 1 : index
    %c0_95 = arith.constant 0 : index
    %c0_96 = arith.constant 0 : index
    %225 = vector.load %arg12[%c1_94, %c0_95, %c0_96] : memref<8x2x256xf32, #tpu.memory_space<vmem>>, vector<1x2x256xf32>
    %226 = vector.shape_cast %225 : vector<1x2x256xf32> to vector<2x256xf32>
    %227 = arith.select %18, %224, %226 : vector<2x256xi1>, vector<2x256xf32>
    %228 = arith.truncf %214 : vector<2x64xf32> to vector<2x64xbf16>
    %cst_97 = arith.constant dense<0.000000e+00> : vector<2x256xf32>
    %229 = tpu.matmul %228, %28, %cst_97 {dimension_numbers = #tpu.dot_dimension_numbers<[1], [0], [0], [1], [0, 0, 1, 1], [], []>} : vector<2x64xbf16>, vector<64x256xbf16>, vector<2x256xf32> -> vector<2x256xf32>
    %230 = arith.addf %227, %229 : vector<2x256xf32>
    %231 = vector.extract_strided_slice %230 {offsets = [0, 0], sizes = [2, 192], strides = [1, 1]} : vector<2x256xf32> to vector<2x192xf32>
    %232 = arith.negf %231 : vector<2x192xf32>
    %233 = math.exp %232 : vector<2x192xf32>
    %cst_98 = arith.constant 1.000000e+00 : f32
    %234 = vector.broadcast %cst_98 : f32 to vector<2x192xf32>
    %235 = arith.addf %234, %233 : vector<2x192xf32>
    %236 = arith.divf %234, %235 : vector<2x192xf32>
    %237 = vector.extract_strided_slice %230 {offsets = [0, 192], sizes = [2, 64], strides = [1, 1]} : vector<2x256xf32> to vector<2x64xf32>
    %238 = math.tanh %237 : vector<2x64xf32>
    %239 = vector.extract_strided_slice %236 {offsets = [0, 0], sizes = [2, 64], strides = [1, 1]} : vector<2x192xf32> to vector<2x64xf32>
    %240 = vector.extract_strided_slice %236 {offsets = [0, 64], sizes = [2, 64], strides = [1, 1]} : vector<2x192xf32> to vector<2x64xf32>
    %241 = vector.extract_strided_slice %236 {offsets = [0, 128], sizes = [2, 64], strides = [1, 1]} : vector<2x192xf32> to vector<2x64xf32>
    %242 = arith.mulf %240, %212 : vector<2x64xf32>
    %243 = arith.mulf %239, %238 : vector<2x64xf32>
    %244 = arith.addf %242, %243 : vector<2x64xf32>
    %245 = math.tanh %244 : vector<2x64xf32>
    %246 = arith.mulf %241, %245 : vector<2x64xf32>
    %247 = vector.extract_strided_slice %246 {offsets = [0, 0], sizes = [2, 32], strides = [1, 1]} : vector<2x64xf32> to vector<2x32xf32>
    %c6_99 = arith.constant 6 : index
    %c0_100 = arith.constant 0 : index
    %c0_101 = arith.constant 0 : index
    %248 = vector.load %arg13[%c6_99, %c0_100, %c0_101] : memref<8x2x64xf32, #tpu.memory_space<vmem>>, vector<1x2x32xf32>
    %249 = vector.shape_cast %248 : vector<1x2x32xf32> to vector<2x32xf32>
    %250 = vector.shape_cast %247 : vector<2x32xf32> to vector<1x2x32xf32>
    tpu.vector_store %arg13[%c6_99, %c0_100, %c0_101], %250 {strides = array<i32>} : memref<8x2x64xf32, #tpu.memory_space<vmem>>, vector<1x2x32xf32>,
    %251 = vector.extract_strided_slice %246 {offsets = [0, 32], sizes = [2, 32], strides = [1, 1]} : vector<2x64xf32> to vector<2x32xf32>
    %c1_102 = arith.constant 1 : index
    %c0_103 = arith.constant 0 : index
    %c32_104 = arith.constant 32 : index
    %252 = vector.load %arg13[%c1_102, %c0_103, %c32_104] : memref<8x2x64xf32, #tpu.memory_space<vmem>>, vector<1x2x32xf32>
    %253 = vector.shape_cast %252 : vector<1x2x32xf32> to vector<2x32xf32>
    %254 = vector.shape_cast %251 : vector<2x32xf32> to vector<1x2x32xf32>
    tpu.vector_store %arg13[%c1_102, %c0_103, %c32_104], %254 {strides = array<i32>} : memref<8x2x64xf32, #tpu.memory_space<vmem>>, vector<1x2x32xf32>,
    %c7_105 = arith.constant 7 : index
    %c0_106 = arith.constant 0 : index
    %c0_107 = arith.constant 0 : index
    %255 = vector.load %arg12[%c7_105, %c0_106, %c0_107] : memref<8x2x256xf32, #tpu.memory_space<vmem>>, vector<1x2x256xf32>
    %256 = vector.shape_cast %255 : vector<1x2x256xf32> to vector<2x256xf32>
    %c0_108 = arith.constant 0 : index
    %c0_109 = arith.constant 0 : index
    %c0_110 = arith.constant 0 : index
    %257 = vector.load %arg12[%c0_108, %c0_109, %c0_110] : memref<8x2x256xf32, #tpu.memory_space<vmem>>, vector<1x2x256xf32>
    %258 = vector.shape_cast %257 : vector<1x2x256xf32> to vector<2x256xf32>
    %259 = arith.select %18, %256, %258 : vector<2x256xi1>, vector<2x256xf32>
    %260 = arith.truncf %246 : vector<2x64xf32> to vector<2x64xbf16>
    %cst_111 = arith.constant dense<0.000000e+00> : vector<2x256xf32>
    %261 = tpu.matmul %260, %28, %cst_111 {dimension_numbers = #tpu.dot_dimension_numbers<[1], [0], [0], [1], [0, 0, 1, 1], [], []>} : vector<2x64xbf16>, vector<64x256xbf16>, vector<2x256xf32> -> vector<2x256xf32>
    %262 = arith.addf %259, %261 : vector<2x256xf32>
    %263 = vector.extract_strided_slice %262 {offsets = [0, 0], sizes = [2, 192], strides = [1, 1]} : vector<2x256xf32> to vector<2x192xf32>
    %264 = arith.negf %263 : vector<2x192xf32>
    %265 = math.exp %264 : vector<2x192xf32>
    %cst_112 = arith.constant 1.000000e+00 : f32
    %266 = vector.broadcast %cst_112 : f32 to vector<2x192xf32>
    %267 = arith.addf %266, %265 : vector<2x192xf32>
    %268 = arith.divf %266, %267 : vector<2x192xf32>
    %269 = vector.extract_strided_slice %262 {offsets = [0, 192], sizes = [2, 64], strides = [1, 1]} : vector<2x256xf32> to vector<2x64xf32>
    %270 = math.tanh %269 : vector<2x64xf32>
    %271 = vector.extract_strided_slice %268 {offsets = [0, 0], sizes = [2, 64], strides = [1, 1]} : vector<2x192xf32> to vector<2x64xf32>
    %272 = vector.extract_strided_slice %268 {offsets = [0, 64], sizes = [2, 64], strides = [1, 1]} : vector<2x192xf32> to vector<2x64xf32>
    %273 = vector.extract_strided_slice %268 {offsets = [0, 128], sizes = [2, 64], strides = [1, 1]} : vector<2x192xf32> to vector<2x64xf32>
    %274 = arith.mulf %272, %244 : vector<2x64xf32>
    %275 = arith.mulf %271, %270 : vector<2x64xf32>
    %276 = arith.addf %274, %275 : vector<2x64xf32>
    %277 = math.tanh %276 : vector<2x64xf32>
    %278 = arith.mulf %273, %277 : vector<2x64xf32>
    %279 = vector.extract_strided_slice %278 {offsets = [0, 0], sizes = [2, 32], strides = [1, 1]} : vector<2x64xf32> to vector<2x32xf32>
    %c7_113 = arith.constant 7 : index
    %c0_114 = arith.constant 0 : index
    %c0_115 = arith.constant 0 : index
    %280 = vector.load %arg13[%c7_113, %c0_114, %c0_115] : memref<8x2x64xf32, #tpu.memory_space<vmem>>, vector<1x2x32xf32>
    %281 = vector.shape_cast %280 : vector<1x2x32xf32> to vector<2x32xf32>
    %282 = vector.shape_cast %279 : vector<2x32xf32> to vector<1x2x32xf32>
    tpu.vector_store %arg13[%c7_113, %c0_114, %c0_115], %282 {strides = array<i32>} : memref<8x2x64xf32, #tpu.memory_space<vmem>>, vector<1x2x32xf32>,
    %283 = vector.extract_strided_slice %278 {offsets = [0, 32], sizes = [2, 32], strides = [1, 1]} : vector<2x64xf32> to vector<2x32xf32>
    %c0_116 = arith.constant 0 : index
    %c0_117 = arith.constant 0 : index
    %c32_118 = arith.constant 32 : index
    %284 = vector.load %arg13[%c0_116, %c0_117, %c32_118] : memref<8x2x64xf32, #tpu.memory_space<vmem>>, vector<1x2x32xf32>
    %285 = vector.shape_cast %284 : vector<1x2x32xf32> to vector<2x32xf32>
    %286 = vector.shape_cast %283 : vector<2x32xf32> to vector<1x2x32xf32>
    tpu.vector_store %arg13[%c0_116, %c0_117, %c32_118], %286 {strides = array<i32>} : memref<8x2x64xf32, #tpu.memory_space<vmem>>, vector<1x2x32xf32>,
    %c0_119 = arith.constant 0 : index
    %c0_120 = arith.constant 0 : index
    %c0_121 = arith.constant 0 : index
    %287 = vector.load %arg13[%c0_119, %c0_120, %c0_121] : memref<8x2x64xf32, #tpu.memory_space<vmem>>, vector<8x2x64xf32>
    %288 = vector.shape_cast %287 : vector<8x2x64xf32> to vector<16x64xf32>
    %289 = arith.truncf %288 : vector<16x64xf32> to vector<16x64xbf16>
    %c0_122 = arith.constant 0 : index
    %c0_123 = arith.constant 0 : index
    %290 = vector.load %arg4[%c0_122, %c0_123] : memref<64x256xbf16, #tpu.memory_space<vmem>>, vector<64x256xbf16>
    %cst_124 = arith.constant dense<0.000000e+00> : vector<16x256xf32>
    %291 = tpu.matmul %289, %290, %cst_124 {dimension_numbers = #tpu.dot_dimension_numbers<[1], [0], [0], [1], [0, 0, 1, 1], [], []>} : vector<16x64xbf16>, vector<64x256xbf16>, vector<16x256xf32> -> vector<16x256xf32>
    %c0_125 = arith.constant 0 : index
    %c0_126 = arith.constant 0 : index
    %292 = vector.load %arg5[%c0_125, %c0_126] : memref<1x256xf32, #tpu.memory_space<vmem>>, vector<1x256xf32>
    %293 = vector.broadcast %292 : vector<1x256xf32> to vector<16x256xf32>
    %294 = arith.addf %291, %293 : vector<16x256xf32>
    %295 = vector.shape_cast %294 : vector<16x256xf32> to vector<8x2x256xf32>
    %c0_127 = arith.constant 0 : index
    %c0_128 = arith.constant 0 : index
    %c0_129 = arith.constant 0 : index
    %296 = vector.load %arg12[%c0_127, %c0_128, %c0_129] : memref<8x2x256xf32, #tpu.memory_space<vmem>>, vector<8x2x256xf32>
    tpu.vector_store %arg12[%c0_127, %c0_128, %c0_129], %295 {strides = array<i32>} : memref<8x2x256xf32, #tpu.memory_space<vmem>>, vector<8x2x256xf32>,
    %c0_130 = arith.constant 0 : index
    %c0_131 = arith.constant 0 : index
    %297 = vector.load %arg6[%c0_130, %c0_131] : memref<64x256xbf16, #tpu.memory_space<vmem>>, vector<64x256xbf16>
    %cst_132 = arith.constant 0.000000e+00 : f32
    %298 = vector.broadcast %cst_132 : f32 to vector<2x64xf32>
    %cst_133 = arith.constant 0.000000e+00 : f32
    %299 = vector.broadcast %cst_133 : f32 to vector<2x64xf32>
    %c0_134 = arith.constant 0 : index
    %c0_135 = arith.constant 0 : index
    %c0_136 = arith.constant 0 : index
    %300 = vector.load %arg12[%c0_134, %c0_135, %c0_136] : memref<8x2x256xf32, #tpu.memory_space<vmem>>, vector<1x2x256xf32>
    %301 = vector.shape_cast %300 : vector<1x2x256xf32> to vector<2x256xf32>
    %c7_137 = arith.constant 7 : index
    %c0_138 = arith.constant 0 : index
    %c0_139 = arith.constant 0 : index
    %302 = vector.load %arg12[%c7_137, %c0_138, %c0_139] : memref<8x2x256xf32, #tpu.memory_space<vmem>>, vector<1x2x256xf32>
    %303 = vector.shape_cast %302 : vector<1x2x256xf32> to vector<2x256xf32>
    %304 = arith.select %18, %301, %303 : vector<2x256xi1>, vector<2x256xf32>
    %305 = arith.truncf %298 : vector<2x64xf32> to vector<2x64xbf16>
    %cst_140 = arith.constant dense<0.000000e+00> : vector<2x256xf32>
    %306 = tpu.matmul %305, %297, %cst_140 {dimension_numbers = #tpu.dot_dimension_numbers<[1], [0], [0], [1], [0, 0, 1, 1], [], []>} : vector<2x64xbf16>, vector<64x256xbf16>, vector<2x256xf32> -> vector<2x256xf32>
    %307 = arith.addf %304, %306 : vector<2x256xf32>
    %308 = vector.extract_strided_slice %307 {offsets = [0, 0], sizes = [2, 192], strides = [1, 1]} : vector<2x256xf32> to vector<2x192xf32>
    %309 = arith.negf %308 : vector<2x192xf32>
    %310 = math.exp %309 : vector<2x192xf32>
    %cst_141 = arith.constant 1.000000e+00 : f32
    %311 = vector.broadcast %cst_141 : f32 to vector<2x192xf32>
    %312 = arith.addf %311, %310 : vector<2x192xf32>
    %313 = arith.divf %311, %312 : vector<2x192xf32>
    %314 = vector.extract_strided_slice %307 {offsets = [0, 192], sizes = [2, 64], strides = [1, 1]} : vector<2x256xf32> to vector<2x64xf32>
    %315 = math.tanh %314 : vector<2x64xf32>
    %316 = vector.extract_strided_slice %313 {offsets = [0, 0], sizes = [2, 64], strides = [1, 1]} : vector<2x192xf32> to vector<2x64xf32>
    %317 = vector.extract_strided_slice %313 {offsets = [0, 64], sizes = [2, 64], strides = [1, 1]} : vector<2x192xf32> to vector<2x64xf32>
    %318 = vector.extract_strided_slice %313 {offsets = [0, 128], sizes = [2, 64], strides = [1, 1]} : vector<2x192xf32> to vector<2x64xf32>
    %319 = arith.mulf %317, %299 : vector<2x64xf32>
    %320 = arith.mulf %316, %315 : vector<2x64xf32>
    %321 = arith.addf %319, %320 : vector<2x64xf32>
    %322 = math.tanh %321 : vector<2x64xf32>
    %323 = arith.mulf %318, %322 : vector<2x64xf32>
    %c1_142 = arith.constant 1 : index
    %c0_143 = arith.constant 0 : index
    %c0_144 = arith.constant 0 : index
    %324 = vector.load %arg12[%c1_142, %c0_143, %c0_144] : memref<8x2x256xf32, #tpu.memory_space<vmem>>, vector<1x2x256xf32>
    %325 = vector.shape_cast %324 : vector<1x2x256xf32> to vector<2x256xf32>
    %c6_145 = arith.constant 6 : index
    %c0_146 = arith.constant 0 : index
    %c0_147 = arith.constant 0 : index
    %326 = vector.load %arg12[%c6_145, %c0_146, %c0_147] : memref<8x2x256xf32, #tpu.memory_space<vmem>>, vector<1x2x256xf32>
    %327 = vector.shape_cast %326 : vector<1x2x256xf32> to vector<2x256xf32>
    %328 = arith.select %18, %325, %327 : vector<2x256xi1>, vector<2x256xf32>
    %329 = arith.truncf %323 : vector<2x64xf32> to vector<2x64xbf16>
    %cst_148 = arith.constant dense<0.000000e+00> : vector<2x256xf32>
    %330 = tpu.matmul %329, %297, %cst_148 {dimension_numbers = #tpu.dot_dimension_numbers<[1], [0], [0], [1], [0, 0, 1, 1], [], []>} : vector<2x64xbf16>, vector<64x256xbf16>, vector<2x256xf32> -> vector<2x256xf32>
    %331 = arith.addf %328, %330 : vector<2x256xf32>
    %332 = vector.extract_strided_slice %331 {offsets = [0, 0], sizes = [2, 192], strides = [1, 1]} : vector<2x256xf32> to vector<2x192xf32>
    %333 = arith.negf %332 : vector<2x192xf32>
    %334 = math.exp %333 : vector<2x192xf32>
    %cst_149 = arith.constant 1.000000e+00 : f32
    %335 = vector.broadcast %cst_149 : f32 to vector<2x192xf32>
    %336 = arith.addf %335, %334 : vector<2x192xf32>
    %337 = arith.divf %335, %336 : vector<2x192xf32>
    %338 = vector.extract_strided_slice %331 {offsets = [0, 192], sizes = [2, 64], strides = [1, 1]} : vector<2x256xf32> to vector<2x64xf32>
    %339 = math.tanh %338 : vector<2x64xf32>
    %340 = vector.extract_strided_slice %337 {offsets = [0, 0], sizes = [2, 64], strides = [1, 1]} : vector<2x192xf32> to vector<2x64xf32>
    %341 = vector.extract_strided_slice %337 {offsets = [0, 64], sizes = [2, 64], strides = [1, 1]} : vector<2x192xf32> to vector<2x64xf32>
    %342 = vector.extract_strided_slice %337 {offsets = [0, 128], sizes = [2, 64], strides = [1, 1]} : vector<2x192xf32> to vector<2x64xf32>
    %343 = arith.mulf %341, %321 : vector<2x64xf32>
    %344 = arith.mulf %340, %339 : vector<2x64xf32>
    %345 = arith.addf %343, %344 : vector<2x64xf32>
    %346 = math.tanh %345 : vector<2x64xf32>
    %347 = arith.mulf %342, %346 : vector<2x64xf32>
    %c2_150 = arith.constant 2 : index
    %c0_151 = arith.constant 0 : index
    %c0_152 = arith.constant 0 : index
    %348 = vector.load %arg12[%c2_150, %c0_151, %c0_152] : memref<8x2x256xf32, #tpu.memory_space<vmem>>, vector<1x2x256xf32>
    %349 = vector.shape_cast %348 : vector<1x2x256xf32> to vector<2x256xf32>
    %c5_153 = arith.constant 5 : index
    %c0_154 = arith.constant 0 : index
    %c0_155 = arith.constant 0 : index
    %350 = vector.load %arg12[%c5_153, %c0_154, %c0_155] : memref<8x2x256xf32, #tpu.memory_space<vmem>>, vector<1x2x256xf32>
    %351 = vector.shape_cast %350 : vector<1x2x256xf32> to vector<2x256xf32>
    %352 = arith.select %18, %349, %351 : vector<2x256xi1>, vector<2x256xf32>
    %353 = arith.truncf %347 : vector<2x64xf32> to vector<2x64xbf16>
    %cst_156 = arith.constant dense<0.000000e+00> : vector<2x256xf32>
    %354 = tpu.matmul %353, %297, %cst_156 {dimension_numbers = #tpu.dot_dimension_numbers<[1], [0], [0], [1], [0, 0, 1, 1], [], []>} : vector<2x64xbf16>, vector<64x256xbf16>, vector<2x256xf32> -> vector<2x256xf32>
    %355 = arith.addf %352, %354 : vector<2x256xf32>
    %356 = vector.extract_strided_slice %355 {offsets = [0, 0], sizes = [2, 192], strides = [1, 1]} : vector<2x256xf32> to vector<2x192xf32>
    %357 = arith.negf %356 : vector<2x192xf32>
    %358 = math.exp %357 : vector<2x192xf32>
    %cst_157 = arith.constant 1.000000e+00 : f32
    %359 = vector.broadcast %cst_157 : f32 to vector<2x192xf32>
    %360 = arith.addf %359, %358 : vector<2x192xf32>
    %361 = arith.divf %359, %360 : vector<2x192xf32>
    %362 = vector.extract_strided_slice %355 {offsets = [0, 192], sizes = [2, 64], strides = [1, 1]} : vector<2x256xf32> to vector<2x64xf32>
    %363 = math.tanh %362 : vector<2x64xf32>
    %364 = vector.extract_strided_slice %361 {offsets = [0, 0], sizes = [2, 64], strides = [1, 1]} : vector<2x192xf32> to vector<2x64xf32>
    %365 = vector.extract_strided_slice %361 {offsets = [0, 64], sizes = [2, 64], strides = [1, 1]} : vector<2x192xf32> to vector<2x64xf32>
    %366 = vector.extract_strided_slice %361 {offsets = [0, 128], sizes = [2, 64], strides = [1, 1]} : vector<2x192xf32> to vector<2x64xf32>
    %367 = arith.mulf %365, %345 : vector<2x64xf32>
    %368 = arith.mulf %364, %363 : vector<2x64xf32>
    %369 = arith.addf %367, %368 : vector<2x64xf32>
    %370 = math.tanh %369 : vector<2x64xf32>
    %371 = arith.mulf %366, %370 : vector<2x64xf32>
    %c3_158 = arith.constant 3 : index
    %c0_159 = arith.constant 0 : index
    %c0_160 = arith.constant 0 : index
    %372 = vector.load %arg12[%c3_158, %c0_159, %c0_160] : memref<8x2x256xf32, #tpu.memory_space<vmem>>, vector<1x2x256xf32>
    %373 = vector.shape_cast %372 : vector<1x2x256xf32> to vector<2x256xf32>
    %c4_161 = arith.constant 4 : index
    %c0_162 = arith.constant 0 : index
    %c0_163 = arith.constant 0 : index
    %374 = vector.load %arg12[%c4_161, %c0_162, %c0_163] : memref<8x2x256xf32, #tpu.memory_space<vmem>>, vector<1x2x256xf32>
    %375 = vector.shape_cast %374 : vector<1x2x256xf32> to vector<2x256xf32>
    %376 = arith.select %18, %373, %375 : vector<2x256xi1>, vector<2x256xf32>
    %377 = arith.truncf %371 : vector<2x64xf32> to vector<2x64xbf16>
    %cst_164 = arith.constant dense<0.000000e+00> : vector<2x256xf32>
    %378 = tpu.matmul %377, %297, %cst_164 {dimension_numbers = #tpu.dot_dimension_numbers<[1], [0], [0], [1], [0, 0, 1, 1], [], []>} : vector<2x64xbf16>, vector<64x256xbf16>, vector<2x256xf32> -> vector<2x256xf32>
    %379 = arith.addf %376, %378 : vector<2x256xf32>
    %380 = vector.extract_strided_slice %379 {offsets = [0, 0], sizes = [2, 192], strides = [1, 1]} : vector<2x256xf32> to vector<2x192xf32>
    %381 = arith.negf %380 : vector<2x192xf32>
    %382 = math.exp %381 : vector<2x192xf32>
    %cst_165 = arith.constant 1.000000e+00 : f32
    %383 = vector.broadcast %cst_165 : f32 to vector<2x192xf32>
    %384 = arith.addf %383, %382 : vector<2x192xf32>
    %385 = arith.divf %383, %384 : vector<2x192xf32>
    %386 = vector.extract_strided_slice %379 {offsets = [0, 192], sizes = [2, 64], strides = [1, 1]} : vector<2x256xf32> to vector<2x64xf32>
    %387 = math.tanh %386 : vector<2x64xf32>
    %388 = vector.extract_strided_slice %385 {offsets = [0, 0], sizes = [2, 64], strides = [1, 1]} : vector<2x192xf32> to vector<2x64xf32>
    %389 = vector.extract_strided_slice %385 {offsets = [0, 64], sizes = [2, 64], strides = [1, 1]} : vector<2x192xf32> to vector<2x64xf32>
    %390 = vector.extract_strided_slice %385 {offsets = [0, 128], sizes = [2, 64], strides = [1, 1]} : vector<2x192xf32> to vector<2x64xf32>
    %391 = arith.mulf %389, %369 : vector<2x64xf32>
    %392 = arith.mulf %388, %387 : vector<2x64xf32>
    %393 = arith.addf %391, %392 : vector<2x64xf32>
    %394 = math.tanh %393 : vector<2x64xf32>
    %395 = arith.mulf %390, %394 : vector<2x64xf32>
    %396 = vector.extract_strided_slice %395 {offsets = [0, 32], sizes = [2, 32], strides = [1, 1]} : vector<2x64xf32> to vector<2x32xf32>
    %c4_166 = arith.constant 4 : index
    %c0_167 = arith.constant 0 : index
    %c0_168 = arith.constant 0 : index
    %397 = vector.load %arg12[%c4_166, %c0_167, %c0_168] : memref<8x2x256xf32, #tpu.memory_space<vmem>>, vector<1x2x256xf32>
    %398 = vector.shape_cast %397 : vector<1x2x256xf32> to vector<2x256xf32>
    %c3_169 = arith.constant 3 : index
    %c0_170 = arith.constant 0 : index
    %c0_171 = arith.constant 0 : index
    %399 = vector.load %arg12[%c3_169, %c0_170, %c0_171] : memref<8x2x256xf32, #tpu.memory_space<vmem>>, vector<1x2x256xf32>
    %400 = vector.shape_cast %399 : vector<1x2x256xf32> to vector<2x256xf32>
    %401 = arith.select %18, %398, %400 : vector<2x256xi1>, vector<2x256xf32>
    %402 = arith.truncf %395 : vector<2x64xf32> to vector<2x64xbf16>
    %cst_172 = arith.constant dense<0.000000e+00> : vector<2x256xf32>
    %403 = tpu.matmul %402, %297, %cst_172 {dimension_numbers = #tpu.dot_dimension_numbers<[1], [0], [0], [1], [0, 0, 1, 1], [], []>} : vector<2x64xbf16>, vector<64x256xbf16>, vector<2x256xf32> -> vector<2x256xf32>
    %404 = arith.addf %401, %403 : vector<2x256xf32>
    %405 = vector.extract_strided_slice %404 {offsets = [0, 0], sizes = [2, 192], strides = [1, 1]} : vector<2x256xf32> to vector<2x192xf32>
    %406 = arith.negf %405 : vector<2x192xf32>
    %407 = math.exp %406 : vector<2x192xf32>
    %cst_173 = arith.constant 1.000000e+00 : f32
    %408 = vector.broadcast %cst_173 : f32 to vector<2x192xf32>
    %409 = arith.addf %408, %407 : vector<2x192xf32>
    %410 = arith.divf %408, %409 : vector<2x192xf32>
    %411 = vector.extract_strided_slice %404 {offsets = [0, 192], sizes = [2, 64], strides = [1, 1]} : vector<2x256xf32> to vector<2x64xf32>
    %412 = math.tanh %411 : vector<2x64xf32>
    %413 = vector.extract_strided_slice %410 {offsets = [0, 0], sizes = [2, 64], strides = [1, 1]} : vector<2x192xf32> to vector<2x64xf32>
    %414 = vector.extract_strided_slice %410 {offsets = [0, 64], sizes = [2, 64], strides = [1, 1]} : vector<2x192xf32> to vector<2x64xf32>
    %415 = vector.extract_strided_slice %410 {offsets = [0, 128], sizes = [2, 64], strides = [1, 1]} : vector<2x192xf32> to vector<2x64xf32>
    %416 = arith.mulf %414, %393 : vector<2x64xf32>
    %417 = arith.mulf %413, %412 : vector<2x64xf32>
    %418 = arith.addf %416, %417 : vector<2x64xf32>
    %419 = math.tanh %418 : vector<2x64xf32>
    %420 = arith.mulf %415, %419 : vector<2x64xf32>
    %421 = vector.extract_strided_slice %420 {offsets = [0, 0], sizes = [2, 32], strides = [1, 1]} : vector<2x64xf32> to vector<2x32xf32>
    %422 = tpu.concatenate %421, %396 in 1 : vector<2x32xf32>, vector<2x32xf32> -> vector<2x64xf32>
    %423 = arith.truncf %422 : vector<2x64xf32> to vector<2x64xbf16>
    %c0_174 = arith.constant 0 : index
    %c0_175 = arith.constant 0 : index
    %424 = vector.load %arg7[%c0_174, %c0_175] : memref<64x10xbf16, #tpu.memory_space<vmem>>, vector<64x10xbf16>
    %cst_176 = arith.constant dense<0.000000e+00> : vector<2x10xf32>
    %425 = tpu.matmul %423, %424, %cst_176 {dimension_numbers = #tpu.dot_dimension_numbers<[1], [0], [0], [1], [0, 0, 1, 1], [], []>} : vector<2x64xbf16>, vector<64x10xbf16>, vector<2x10xf32> -> vector<2x10xf32>
    %c0_177 = arith.constant 0 : index
    %c0_178 = arith.constant 0 : index
    %426 = vector.load %arg8[%c0_177, %c0_178] : memref<1x10xf32, #tpu.memory_space<vmem>>, vector<1x10xf32>
    %427 = vector.broadcast %426 : vector<1x10xf32> to vector<2x10xf32>
    %428 = arith.addf %425, %427 : vector<2x10xf32>
    %cst_179 = arith.constant 0.000000e+00 : f32
    %429 = vector.broadcast %cst_179 : f32 to vector<2x10xf32>
    %430 = arith.maximumf %428, %429 : vector<2x10xf32>
    %431 = arith.truncf %430 : vector<2x10xf32> to vector<2x10xbf16>
    %c0_180 = arith.constant 0 : index
    %c0_181 = arith.constant 0 : index
    %432 = vector.load %arg9[%c0_180, %c0_181] : memref<10x4xbf16, #tpu.memory_space<vmem>>, vector<10x4xbf16>
    %cst_182 = arith.constant dense<0.000000e+00> : vector<2x4xf32>
    %433 = tpu.matmul %431, %432, %cst_182 {dimension_numbers = #tpu.dot_dimension_numbers<[1], [0], [0], [1], [0, 0, 1, 1], [], []>} : vector<2x10xbf16>, vector<10x4xbf16>, vector<2x4xf32> -> vector<2x4xf32>
    %c0_183 = arith.constant 0 : index
    %c0_184 = arith.constant 0 : index
    %434 = vector.load %arg10[%c0_183, %c0_184] : memref<1x4xf32, #tpu.memory_space<vmem>>, vector<1x4xf32>
    %435 = vector.broadcast %434 : vector<1x4xf32> to vector<2x4xf32>
    %436 = arith.addf %433, %435 : vector<2x4xf32>
    %437 = arith.negf %436 : vector<2x4xf32>
    %438 = math.exp %437 : vector<2x4xf32>
    %cst_185 = arith.constant 1.000000e+00 : f32
    %439 = vector.broadcast %cst_185 : f32 to vector<2x4xf32>
    %440 = arith.addf %439, %438 : vector<2x4xf32>
    %441 = arith.divf %439, %440 : vector<2x4xf32>
    %c0_186 = arith.constant 0 : index
    %c0_187 = arith.constant 0 : index
    %442 = vector.load %arg11[%c0_186, %c0_187] : memref<2x4xf32, #tpu.memory_space<vmem>>, vector<2x4xf32>
    tpu.vector_store %arg11[%c0_186, %c0_187], %441 {strides = array<i32>} : memref<2x4xf32, #tpu.memory_space<vmem>>, vector<2x4xf32>,
    return
  }
}

</mosaic_0001>

<llo_original>
// kernel: tpu_custom_call.1
$region0: #{tpu_custom_call.1}
  #allocation0 [shape = 'u32[]', space=smem, size = 0x4, offset = 0x4, fixed_abs, tag = 'smem constant byte address 0x4 - core index']
  #allocation1 [shape = 'u32[144,128]{1,0:T(1,128)}', space=vmem, size = 0x12000, scoped, tag = 'internal scratch']
  #allocation2 [shape = 'f32[8,2,256]{2,1,0:T(2,128)}', space=vmem, size = 0x4000, scoped, tag = 'scratch operand']
  #allocation3 [shape = 'f32[8,2,64]{2,1,0:T(2,128)}', space=vmem, size = 0x2000, scoped, tag = 'scratch operand']
  %s0 = inlined_call_operand.vmem [shape: f32[16,16], index: 0, kind: input, shape index: {}]
  %s1 = inlined_call_operand.vmem [shape: bf16[16,256], index: 1, kind: input, shape index: {}]
  %s2 = inlined_call_operand.vmem [shape: f32[1,256], index: 2, kind: input, shape index: {}]
  %s3 = inlined_call_operand.hbm [shape: bf16[64,256], index: 3, kind: input, shape index: {}]
  %s4 = inlined_call_operand.hbm [shape: bf16[64,256], index: 4, kind: input, shape index: {}]
  %s5 = inlined_call_operand.vmem [shape: f32[1,256], index: 5, kind: input, shape index: {}]
  %s6 = inlined_call_operand.hbm [shape: bf16[64,256], index: 6, kind: input, shape index: {}]
  %s7 = inlined_call_operand.vmem [shape: bf16[64,10], index: 7, kind: input, shape index: {}]
  %s8 = inlined_call_operand.vmem [shape: f32[1,10], index: 8, kind: input, shape index: {}]
  %s9 = inlined_call_operand.vmem [shape: bf16[10,4], index: 9, kind: input, shape index: {}]
  %s10 = inlined_call_operand.vmem [shape: f32[1,4], index: 10, kind: input, shape index: {}]
  %s11 = inlined_call_operand.hbm [shape: f32[2,4], index: 11, kind: output, shape index: {}]
  %s12 = sld [smem:[#allocation0]]
  $region66: #{tpu_custom_call.1} parent=0
    _
  %s14 = ssub.s32 1, %s12
  %s15 = scalar_select 0, %s14, %s12
  $region1: #{tpu_custom_call.1} parent=0
    #allocation4 [shape = 'u8[32768]{0}', space=vmem, size = 0x8000, scoped, tag = 'input window, operand 3, single buffered']
    #allocation5 [shape = 's32[1]{0}', space=sflag, size = 0x4, scoped, tag = 'scoped memory for tpu_custom_call.1']
    #allocation6 [shape = 's32[1]{0}', space=sflag, size = 0x4, scoped, tag = 'scoped memory for tpu_custom_call.1']
    #allocation7 [shape = 'u8[32768]{0}', space=vmem, size = 0x8000, scoped, tag = 'input window, operand 4, single buffered']
    #allocation8 [shape = 's32[1]{0}', space=sflag, size = 0x4, scoped, tag = 'scoped memory for tpu_custom_call.1']
    #allocation9 [shape = 'u8[32768]{0}', space=vmem, size = 0x8000, scoped, tag = 'input window, operand 6, single buffered']
    #allocation10 [shape = 'u8[1024]{0}', space=vmem, size = 0x400, scoped, tag = 'output window, operand 0, single buffered']
    %16 = vsyncpa [#allocation5], 0
    %17 = vsyncpa [#allocation8], 0
    %18 = vsyncpa [#allocation6], 0
    // Predicated region
    $region2: #{tpu_custom_call.1} parent=1 // pred_check
      _
    $region3: #{tpu_custom_call.1} parent=1 // pred_check_branch
      %20 = sbr.rel (0) target = $region5
    $region4: #{tpu_custom_call.1} parent=1 // pred_region
      _
    $region5: #{tpu_custom_call.1} parent=1 // pred_fallthru
      _
    // Predicated region
    $region6: #{tpu_custom_call.1} parent=1 // pred_check
      _
    $region7: #{tpu_custom_call.1} parent=1 // pred_check_branch
      %22 = sbr.rel (0) target = $region9
    $region8: #{tpu_custom_call.1} parent=1 // pred_region
      _
    $region9: #{tpu_custom_call.1} parent=1 // pred_fallthru
      _
    // Predicated region
    $region10: #{tpu_custom_call.1} parent=1 // pred_check
      _
    $region11: #{tpu_custom_call.1} parent=1 // pred_check_branch
      %24 = sbr.rel (0) target = $region13
    $region12: #{tpu_custom_call.1} parent=1 // pred_region
      _
    $region13: #{tpu_custom_call.1} parent=1 // pred_fallthru
      _
    // Predicated region
    $region14: #{tpu_custom_call.1} parent=1 // pred_check
      _
    $region15: #{tpu_custom_call.1} parent=1 // pred_check_branch
      %26 = sbr.rel (0) target = $region17
    $region16: #{tpu_custom_call.1} parent=1 // pred_region
      %s28 = ssub.s32 1024, 1024
      %29 = vsyncadd [#allocation5], %s28
      %s30 = sshll.u32 [#allocation4], 4
      %s31 = int_to_ptr.vmem [resolvable:$true] %s30
      %36 = dma.hbm_to_vmem [thread:$0]  %s3, 1024, %s31, [#allocation5], 128, 128, 8
    $region17: #{tpu_custom_call.1} parent=1 // pred_fallthru
      _
    // Predicated region
    $region18: #{tpu_custom_call.1} parent=1 // pred_check
      _
    $region19: #{tpu_custom_call.1} parent=1 // pred_check_branch
      %38 = sbr.rel (0) target = $region21
    $region20: #{tpu_custom_call.1} parent=1 // pred_region
      %s40 = ssub.s32 1024, 1024
      %41 = vsyncadd [#allocation8], %s40
      %s42 = sshll.u32 [#allocation7], 4
      %s43 = int_to_ptr.vmem [resolvable:$true] %s42
      %48 = dma.hbm_to_vmem [thread:$0]  %s4, 1024, %s43, [#allocation8], 128, 128, 8
    $region21: #{tpu_custom_call.1} parent=1 // pred_fallthru
      _
    // Predicated region
    $region22: #{tpu_custom_call.1} parent=1 // pred_check
      _
    $region23: #{tpu_custom_call.1} parent=1 // pred_check_branch
      %50 = sbr.rel (0) target = $region25
    $region24: #{tpu_custom_call.1} parent=1 // pred_region
      _
    $region25: #{tpu_custom_call.1} parent=1 // pred_fallthru
      _
    // Predicated region
    $region26: #{tpu_custom_call.1} parent=1 // pred_check
      _
    $region27: #{tpu_custom_call.1} parent=1 // pred_check_branch
      %52 = sbr.rel (0) target = $region29
    $region28: #{tpu_custom_call.1} parent=1 // pred_region
      %s54 = ssub.s32 1024, 1024
      %55 = vsyncadd [#allocation8], %s54
      %s56 = sshll.u32 [#allocation9], 4
      %s57 = int_to_ptr.vmem [resolvable:$true] %s56
      %62 = dma.hbm_to_vmem [thread:$0]  %s6, 1024, %s57, [#allocation8], 128, 128, 8
    $region29: #{tpu_custom_call.1} parent=1 // pred_fallthru
      _
    // Predicated region
    $region30: #{tpu_custom_call.1} parent=1 // pred_check
      _
    $region31: #{tpu_custom_call.1} parent=1 // pred_check_branch
      %64 = sbr.rel (0) target = $region33
    $region32: #{tpu_custom_call.1} parent=1 // pred_region
      _
    $region33: #{tpu_custom_call.1} parent=1 // pred_fallthru
      _
    // Predicated region
    $region34: #{tpu_custom_call.1} parent=1 // pred_check
      _
    $region35: #{tpu_custom_call.1} parent=1 // pred_check_branch
      %66 = sbr.rel (0) target = $region37
    $region36: #{tpu_custom_call.1} parent=1 // pred_region
      _
    $region37: #{tpu_custom_call.1} parent=1 // pred_fallthru
      _
    // Predicated region
    $region38: #{tpu_custom_call.1} parent=1 // pred_check
      _
    $region39: #{tpu_custom_call.1} parent=1 // pred_check_branch
      %68 = sbr.rel (0) target = $region41
    $region40: #{tpu_custom_call.1} parent=1 // pred_region
      _
    $region41: #{tpu_custom_call.1} parent=1 // pred_fallthru
      _
    // Predicated region
    $region42: #{tpu_custom_call.1} parent=1 // pred_check
      _
    $region43: #{tpu_custom_call.1} parent=1 // pred_check_branch
      %70 = sbr.rel (0) target = $region45
    $region44: #{tpu_custom_call.1} parent=1 // pred_region
      _
    $region45: #{tpu_custom_call.1} parent=1 // pred_fallthru
      _
    // Predicated region
    $region46: #{tpu_custom_call.1} parent=1 // pred_check
      _
    $region47: #{tpu_custom_call.1} parent=1 // pred_check_branch
      %72 = sbr.rel (0) target = $region49
    $region48: #{tpu_custom_call.1} parent=1 // pred_region
      %73 = dma.done [#allocation5], 1024
    $region49: #{tpu_custom_call.1} parent=1 // pred_fallthru
      _
    // Predicated region
    $region50: #{tpu_custom_call.1} parent=1 // pred_check
      _
    $region51: #{tpu_custom_call.1} parent=1 // pred_check_branch
      %75 = sbr.rel (0) target = $region53
    $region52: #{tpu_custom_call.1} parent=1 // pred_region
      %76 = dma.done [#allocation8], 1024
    $region53: #{tpu_custom_call.1} parent=1 // pred_fallthru
      _
    // Predicated region
    $region54: #{tpu_custom_call.1} parent=1 // pred_check
      _
    $region55: #{tpu_custom_call.1} parent=1 // pred_check_branch
      %78 = sbr.rel (0) target = $region57
    $region56: #{tpu_custom_call.1} parent=1 // pred_region
      %79 = dma.done [#allocation8], 1024
    $region57: #{tpu_custom_call.1} parent=1 // pred_fallthru
      _
    %v81 = vlaneseq
    %v82 = vand.u32 %v81, 127
    %v83 = vadd.s32 %v82, 128
    %vm84 = vcmp.lt.s32.totalorder %v82, 0
    %v85 = vsub.s32 0, %v82
    %v86 = vsel %vm84, %v85, %v82
    %v87 = vshrl.u32 %v86, 6
    %v88 = vand.u32 %v86, 63
    %v89 = vsub.s32 0, %v88
    %v90 = vsel %vm84, %v89, %v88
    %vm91 = vcmp.lt.s32.totalorder %v83, 0
    %v92 = vsub.s32 0, %v83
    %v93 = vsel %vm91, %v92, %v83
    %v94 = vshrl.u32 %v93, 6
    %v95 = vand.u32 %v93, 63
    %v96 = vsub.s32 0, %v95
    %v97 = vsel %vm91, %v96, %v95
    %vm98 = vcmp.ne.s32.totalorder %v90, 0
    %vm99 = vcmp.ne.s32.totalorder %v97, 0
    %vm100 = vcmp.lt.s32.totalorder %v90, 0
    %vm101 = vcmp.lt.s32.totalorder %v97, 0
    %vm102 = vmand %vm100, %vm98
    %vm103 = vmand %vm101, %vm99
    %v104 = vadd.s32 %v90, 64
    %v105 = vadd.s32 %v97, 64
    %v106 = vsel %vm102, %v104, %v90
    %v107 = vsel %vm103, %v105, %v97
    %vm108 = vcmp.lt.s32.totalorder %v106, 32
    %vm109 = vcmp.lt.s32.totalorder %v107, 32
    %v110 = vld [vmem:[%s0] sm:$0xff]
    %v111 = vld [vmem:[%s0 + $0x8] sm:$0xff]
    %v112 = vpack.c.bf16 %v111, %v110
    %v113 = vld [vmem:[%s1] sm:$0xff]
    %v114 = vld [vmem:[%s1 + $0x8] sm:$0xff]
    %v115 = vld [vmem:[%s2] sm:$0x3]
    %v117 = vlaneseq
    %v118 = vshrl.u32 %v117, 7
    %v119 = vsub.s32 0, %v118
    %v120 = vrot.slane %v115, %v119
    %v121 = vlaneseq
    %v122 = vshrl.u32 %v121, 7
    %v123 = vsub.s32 1, %v122
    %v124 = vrot.slane %v115, %v123
    %v129 = vunpack.c.l.b16 %v113
    %v130 = vunpack.c.h.b16 %v113
    %v131 = vunpack.c.l.b16 %v114
    %v132 = vunpack.c.h.b16 %v114
    %v133 = vpack.c.b16 %v131, %v129
    %v134 = vpack.c.b16 %v132, %v130
    %vm137 = vcmask 130048
    %v139 = vsel %vm137, %v112, 0
    %141 = vmatprep.subr.bf16.mxu0 0
    %142 = vmatpush1.bf16.msra.mxu0 0
    %143 = vmatprep.subr.bf16.mxu0 0
    %144 = vmatpush1.bf16.msra.mxu0 0
    %145 = vmatprep.subr.bf16.mxu0 0
    %146 = vmatpush1.bf16.msra.mxu0 0
    %147 = vmatprep.subr.bf16.mxu0 0
    %148 = vmatpush1.bf16.msra.mxu0 0
    %149 = vmatprep.subr.bf16.mxu0 0
    %150 = vmatpush1.bf16.msra.mxu0 0
    %151 = vmatprep.subr.bf16.mxu0 0
    %152 = vmatpush1.bf16.msra.mxu0 0
    %153 = vmatprep.subr.bf16.mxu0 0
    %154 = vmatpush1.bf16.msra.mxu0 0
    %155 = vmatprep.subr.bf16.mxu0 %v134
    %156 = vmatpush1.bf16.msra.mxu0 %v133
    %157 = vmatprep.subr.bf16.mxu0 0
    %158 = vmatpush2.bf16.msra.mxu0 0
    %159 = vmatprep.subr.bf16.mxu0 0
    %160 = vmatpush2.bf16.msra.mxu0 0
    %161 = vmatprep.subr.bf16.mxu0 0
    %162 = vmatpush2.bf16.msra.mxu0 0
    %163 = vmatprep.subr.bf16.mxu0 0
    %164 = vmatpush2.bf16.msra.mxu0 0
    %165 = vmatprep.subr.bf16.mxu0 0
    %166 = vmatpush2.bf16.msra.mxu0 0
    %167 = vmatprep.subr.bf16.mxu0 0
    %168 = vmatpush2.bf16.msra.mxu0 0
    %169 = vmatprep.subr.bf16.mxu0 0
    %170 = vmatpush2.bf16.msra.mxu0 0
    %171 = vmatprep.subr.bf16.mxu0 0
    %172 = vmatpush2.bf16.msra.mxu0 0
    %173 = vmatprep.mubr.bf16.mxu0 0
    %174 = vmatmul.mubr.bf16.gmra.mxu0 %v139
    %v175 = vpop.f32.mrf.mxu0
    %v176 = vadd.f32 %v120, %v175
    %v177 = vpop.f32.mrf.mxu0
    %v178 = vadd.f32 %v124, %v177
    %v179 = vpop.f32.mrf.mxu0
    %v180 = vadd.f32 %v120, %v179
    %v181 = vpop.f32.mrf.mxu0
    %v182 = vadd.f32 %v124, %v181
    %183 = vdwg.mxu0
    %v188 = vcombine.low %v176, %v178
    %v189 = vcombine.high %v176, %v178
    %v191 = vunpack.c.l.s4 1983009808
    %v192 = vunpack.c.0.s8 %v191
    %v193 = vlaneseq
    %v194 = vshrl.u32 %v193, 7
    %v195 = vsub.s32 %v192, %v194
    %v196 = vrot.slane %v188, %v195
    %v198 = vunpack.c.l.s4 1983009808
    %v199 = vunpack.c.0.s8 %v198
    %v200 = vlaneseq
    %v201 = vshrl.u32 %v200, 7
    %v202 = vsub.s32 %v199, %v201
    %v203 = vrot.slane %v189, %v202
    %v204 = vcombine.high %v196, %v196
    %v205 = vcombine.high %v203, %v203
    %v206 = vcombine.low %v180, %v182
    %v207 = vcombine.high %v180, %v182
    %v209 = vunpack.c.l.s4 1983009808
    %v210 = vunpack.c.0.s8 %v209
    %v211 = vlaneseq
    %v212 = vshrl.u32 %v211, 7
    %v213 = vsub.s32 %v210, %v212
    %v214 = vrot.slane %v206, %v213
    %v216 = vunpack.c.l.s4 1983009808
    %v217 = vunpack.c.0.s8 %v216
    %v218 = vlaneseq
    %v219 = vshrl.u32 %v218, 7
    %v220 = vsub.s32 %v217, %v219
    %v221 = vrot.slane %v207, %v220
    %v222 = vcombine.high %v214, %v214
    %v223 = vcombine.high %v221, %v221
    %232 = vst [vmem:[#allocation2] sm:$0xf] %v196
    %233 = vst [vmem:[#allocation2 + $0x4] sm:$0xf] %v204
    %234 = vst [vmem:[#allocation2 + $0x8] sm:$0xf] %v203
    %235 = vst [vmem:[#allocation2 + $0xc] sm:$0xf] %v205
    %236 = vst [vmem:[#allocation2 + $0x10] sm:$0xf] %v214
    %237 = vst [vmem:[#allocation2 + $0x14] sm:$0xf] %v222
    %238 = vst [vmem:[#allocation2 + $0x18] sm:$0xf] %v221
    %239 = vst [vmem:[#allocation2 + $0x1c] sm:$0xf] %v223
    %v240 = vld [vmem:[#allocation4] sm:$0xff]
    %v241 = vld [vmem:[#allocation4 + $0x8] sm:$0xff]
    %v242 = vld [vmem:[#allocation4 + $0x10] sm:$0xff]
    %v243 = vld [vmem:[#allocation4 + $0x18] sm:$0xff]
    %v244 = vld [vmem:[#allocation4 + $0x20] sm:$0xff]
    %v245 = vld [vmem:[#allocation4 + $0x28] sm:$0xff]
    %v246 = vld [vmem:[#allocation4 + $0x30] sm:$0xff]
    %v247 = vld [vmem:[#allocation4 + $0x38] sm:$0xff]
    %v248 = vld [vmem:[#allocation2] sm:$0xf]
    %s249 = scalar_lea.vmem [#allocation2], 28
    %v250 = vld [vmem:[%s249] sm:$0xf]
    %v253 = vunpack.c.l.s4 1983009808
    %v254 = vunpack.c.0.s8 %v253
    %v255 = vlaneseq
    %v256 = vshrl.u32 %v255, 7
    %v257 = vsub.s32 %v254, %v256
    %v258 = vrot.slane %v248, %v257
    %v259 = vcombine.high %v258, %v258
    %v264 = vunpack.c.l.s4 1983009808
    %v265 = vunpack.c.0.s8 %v264
    %v266 = vlaneseq
    %v267 = vshrl.u32 %v266, 7
    %v268 = vsub.s32 %v265, %v267
    %v269 = vrot.slane %v250, %v268
    %v270 = vcombine.high %v269, %v269
    %v273 = vsel %vm108, %v258, %v269
    %v274 = vsel %vm109, %v259, %v270
    %v283 = vunpack.c.l.b16 %v240
    %v284 = vunpack.c.h.b16 %v240
    %v285 = vunpack.c.l.b16 %v241
    %v286 = vunpack.c.h.b16 %v241
    %v287 = vunpack.c.l.b16 %v242
    %v288 = vunpack.c.h.b16 %v242
    %v289 = vunpack.c.l.b16 %v243
    %v290 = vunpack.c.h.b16 %v243
    %v291 = vunpack.c.l.b16 %v244
    %v292 = vunpack.c.h.b16 %v244
    %v293 = vunpack.c.l.b16 %v245
    %v294 = vunpack.c.h.b16 %v245
    %v295 = vunpack.c.l.b16 %v246
    %v296 = vunpack.c.h.b16 %v246
    %v297 = vunpack.c.l.b16 %v247
    %v298 = vunpack.c.h.b16 %v247
    %v299 = vpack.c.b16 %v285, %v283
    %v300 = vpack.c.b16 %v286, %v284
    %v301 = vpack.c.b16 %v289, %v287
    %v302 = vpack.c.b16 %v290, %v288
    %v303 = vpack.c.b16 %v293, %v291
    %v304 = vpack.c.b16 %v294, %v292
    %v305 = vpack.c.b16 %v297, %v295
    %v306 = vpack.c.b16 %v298, %v296
    %vm315 = vcmask 523264
    %v317 = vsel %vm315, 0, 0
    %319 = vmatprep.subr.bf16.mxu0 0
    %320 = vmatpush1.bf16.msra.mxu0 0
    %321 = vmatprep.subr.bf16.mxu0 0
    %322 = vmatpush1.bf16.msra.mxu0 0
    %323 = vmatprep.subr.bf16.mxu0 0
    %324 = vmatpush1.bf16.msra.mxu0 0
    %325 = vmatprep.subr.bf16.mxu0 0
    %326 = vmatpush1.bf16.msra.mxu0 0
    %327 = vmatprep.subr.bf16.mxu0 %v306
    %328 = vmatpush1.bf16.msra.mxu0 %v305
    %329 = vmatprep.subr.bf16.mxu0 %v304
    %330 = vmatpush1.bf16.msra.mxu0 %v303
    %331 = vmatprep.subr.bf16.mxu0 %v302
    %332 = vmatpush1.bf16.msra.mxu0 %v301
    %333 = vmatprep.subr.bf16.mxu0 %v300
    %334 = vmatpush1.bf16.msra.mxu0 %v299
    %335 = vmatprep.subr.bf16.mxu0 0
    %336 = vmatpush2.bf16.msra.mxu0 0
    %337 = vmatprep.subr.bf16.mxu0 0
    %338 = vmatpush2.bf16.msra.mxu0 0
    %339 = vmatprep.subr.bf16.mxu0 0
    %340 = vmatpush2.bf16.msra.mxu0 0
    %341 = vmatprep.subr.bf16.mxu0 0
    %342 = vmatpush2.bf16.msra.mxu0 0
    %343 = vmatprep.subr.bf16.mxu0 0
    %344 = vmatpush2.bf16.msra.mxu0 0
    %345 = vmatprep.subr.bf16.mxu0 0
    %346 = vmatpush2.bf16.msra.mxu0 0
    %347 = vmatprep.subr.bf16.mxu0 0
    %348 = vmatpush2.bf16.msra.mxu0 0
    %349 = vmatprep.subr.bf16.mxu0 0
    %350 = vmatpush2.bf16.msra.mxu0 0
    %351 = vmatprep.mubr.bf16.mxu0 0
    %352 = vmatmul.mubr.bf16.gmra.mxu0 %v317
    %v353 = vpop.f32.mrf.mxu0
    %v354 = vadd.f32 0.0, %v353
    %v355 = vpop.f32.mrf.mxu0
    %v356 = vadd.f32 0.0, %v355
    %v357 = vpop.f32.mrf.mxu0
    %v358 = vpop.f32.mrf.mxu0
    %359 = vdwg.mxu0
    %v360 = vadd.f32 %v273, %v354
    %v361 = vadd.f32 %v274, %v356
    %v362 = vxor.u32 %v360, 2147483648
    %v363 = vxor.u32 %v361, 2147483648
    %v364 = vmul.f32 %v362, 1.442695
    %v365 = vpow.pop %v364
    %v366 = vmul.f32 %v363, 1.442695
    %v367 = vpow.pop %v366
    %v368 = vadd.f32 %v365, 1.0
    %v369 = vadd.f32 %v367, 1.0
    %v370 = vrcp.pop %v368
    %v371 = vmul.f32 1.0, %v370
    %v372 = vrcp.pop %v369
    %v373 = vmul.f32 1.0, %v372
    %v374 = vtanh.pop %v361
    %v375 = vmul.f32 %v371, 0.0
    %377 = vrot.lane.b32.xlu0 %v374, 64
    %v378 = vpop.permute.xlu0 %377
    %v380 = vmul.f32 %v371, %v378
    %382 = vrot.lane.b32.xlu0 %v380, 64
    %v383 = vpop.permute.xlu0 %382
    %v385 = vadd.f32 %v375, %v383
    %v386 = vtanh.pop %v385
    %388 = vrot.lane.b32.xlu0 %v386, 64
    %v389 = vpop.permute.xlu0 %388
    %v391 = vmul.f32 %v373, %v389
    %vm392 = vcmask 254976
    %393 = vst.msk [vmem:[#allocation3] sm:$0x3] %vm392, %v391
    %s394 = scalar_lea.vmem [#allocation3], 14
    %vm395 = vcmask 517376
    %396 = vst.msk [vmem:[%s394] sm:$0x3] %vm395, %v391
    %s397 = scalar_lea.vmem [#allocation2], 4
    %v398 = vld [vmem:[%s397] sm:$0xf]
    %s399 = scalar_lea.vmem [#allocation2], 24
    %v400 = vld [vmem:[%s399] sm:$0xf]
    %v403 = vunpack.c.l.s4 1983009808
    %v404 = vunpack.c.0.s8 %v403
    %v405 = vlaneseq
    %v406 = vshrl.u32 %v405, 7
    %v407 = vsub.s32 %v404, %v406
    %v408 = vrot.slane %v398, %v407
    %v409 = vcombine.high %v408, %v408
    %v414 = vunpack.c.l.s4 1983009808
    %v415 = vunpack.c.0.s8 %v414
    %v416 = vlaneseq
    %v417 = vshrl.u32 %v416, 7
    %v418 = vsub.s32 %v415, %v417
    %v419 = vrot.slane %v400, %v418
    %v420 = vcombine.high %v419, %v419
    %v423 = vsel %vm108, %v408, %v419
    %v424 = vsel %vm109, %v409, %v420
    %v425 = vpack.c.bf16 %v391, %v391
    %v427 = vsel %vm315, %v425, 0
    %429 = vmatprep.subr.bf16.mxu0 0
    %430 = vmatpush1.bf16.msra.mxu0 0
    %431 = vmatprep.subr.bf16.mxu0 0
    %432 = vmatpush1.bf16.msra.mxu0 0
    %433 = vmatprep.subr.bf16.mxu0 0
    %434 = vmatpush1.bf16.msra.mxu0 0
    %435 = vmatprep.subr.bf16.mxu0 0
    %436 = vmatpush1.bf16.msra.mxu0 0
    %437 = vmatprep.subr.bf16.mxu0 %v306
    %438 = vmatpush1.bf16.msra.mxu0 %v305
    %439 = vmatprep.subr.bf16.mxu0 %v304
    %440 = vmatpush1.bf16.msra.mxu0 %v303
    %441 = vmatprep.subr.bf16.mxu0 %v302
    %442 = vmatpush1.bf16.msra.mxu0 %v301
    %443 = vmatprep.subr.bf16.mxu0 %v300
    %444 = vmatpush1.bf16.msra.mxu0 %v299
    %445 = vmatprep.subr.bf16.mxu0 0
    %446 = vmatpush2.bf16.msra.mxu0 0
    %447 = vmatprep.subr.bf16.mxu0 0
    %448 = vmatpush2.bf16.msra.mxu0 0
    %449 = vmatprep.subr.bf16.mxu0 0
    %450 = vmatpush2.bf16.msra.mxu0 0
    %451 = vmatprep.subr.bf16.mxu0 0
    %452 = vmatpush2.bf16.msra.mxu0 0
    %453 = vmatprep.subr.bf16.mxu0 0
    %454 = vmatpush2.bf16.msra.mxu0 0
    %455 = vmatprep.subr.bf16.mxu0 0
    %456 = vmatpush2.bf16.msra.mxu0 0
    %457 = vmatprep.subr.bf16.mxu0 0
    %458 = vmatpush2.bf16.msra.mxu0 0
    %459 = vmatprep.subr.bf16.mxu0 0
    %460 = vmatpush2.bf16.msra.mxu0 0
    %461 = vmatprep.mubr.bf16.mxu0 0
    %462 = vmatmul.mubr.bf16.gmra.mxu0 %v427
    %v463 = vpop.f32.mrf.mxu0
    %v464 = vadd.f32 0.0, %v463
    %v465 = vpop.f32.mrf.mxu0
    %v466 = vadd.f32 0.0, %v465
    %v467 = vpop.f32.mrf.mxu0
    %v468 = vpop.f32.mrf.mxu0
    %469 = vdwg.mxu0
    %v470 = vadd.f32 %v423, %v464
    %v471 = vadd.f32 %v424, %v466
    %v472 = vxor.u32 %v470, 2147483648
    %v473 = vxor.u32 %v471, 2147483648
    %v474 = vmul.f32 %v472, 1.442695
    %v475 = vpow.pop %v474
    %v476 = vmul.f32 %v473, 1.442695
    %v477 = vpow.pop %v476
    %v478 = vadd.f32 %v475, 1.0
    %v479 = vadd.f32 %v477, 1.0
    %v480 = vrcp.pop %v478
    %v481 = vmul.f32 1.0, %v480
    %v482 = vrcp.pop %v479
    %v483 = vmul.f32 1.0, %v482
    %v484 = vtanh.pop %v471
    %v485 = vmul.f32 %v481, %v385
    %487 = vrot.lane.b32.xlu0 %v484, 64
    %v488 = vpop.permute.xlu0 %487
    %v490 = vmul.f32 %v481, %v488
    %492 = vrot.lane.b32.xlu0 %v490, 64
    %v493 = vpop.permute.xlu0 %492
    %v495 = vadd.f32 %v485, %v493
    %v496 = vtanh.pop %v495
    %498 = vrot.lane.b32.xlu0 %v496, 64
    %v499 = vpop.permute.xlu0 %498
    %v501 = vmul.f32 %v483, %v499
    %s502 = scalar_lea.vmem [#allocation3], 2
    %503 = vst.msk [vmem:[%s502] sm:$0x3] %vm392, %v501
    %s504 = scalar_lea.vmem [#allocation3], 12
    %505 = vst.msk [vmem:[%s504] sm:$0x3] %vm395, %v501
    %s506 = scalar_lea.vmem [#allocation2], 8
    %v507 = vld [vmem:[%s506] sm:$0xf]
    %s508 = scalar_lea.vmem [#allocation2], 20
    %v509 = vld [vmem:[%s508] sm:$0xf]
    %v512 = vunpack.c.l.s4 1983009808
    %v513 = vunpack.c.0.s8 %v512
    %v514 = vlaneseq
    %v515 = vshrl.u32 %v514, 7
    %v516 = vsub.s32 %v513, %v515
    %v517 = vrot.slane %v507, %v516
    %v518 = vcombine.high %v517, %v517
    %v523 = vunpack.c.l.s4 1983009808
    %v524 = vunpack.c.0.s8 %v523
    %v525 = vlaneseq
    %v526 = vshrl.u32 %v525, 7
    %v527 = vsub.s32 %v524, %v526
    %v528 = vrot.slane %v509, %v527
    %v529 = vcombine.high %v528, %v528
    %v532 = vsel %vm108, %v517, %v528
    %v533 = vsel %vm109, %v518, %v529
    %v534 = vpack.c.bf16 %v501, %v501
    %v536 = vsel %vm315, %v534, 0
    %538 = vmatprep.subr.bf16.mxu0 0
    %539 = vmatpush1.bf16.msra.mxu0 0
    %540 = vmatprep.subr.bf16.mxu0 0
    %541 = vmatpush1.bf16.msra.mxu0 0
    %542 = vmatprep.subr.bf16.mxu0 0
    %543 = vmatpush1.bf16.msra.mxu0 0
    %544 = vmatprep.subr.bf16.mxu0 0
    %545 = vmatpush1.bf16.msra.mxu0 0
    %546 = vmatprep.subr.bf16.mxu0 %v306
    %547 = vmatpush1.bf16.msra.mxu0 %v305
    %548 = vmatprep.subr.bf16.mxu0 %v304
    %549 = vmatpush1.bf16.msra.mxu0 %v303
    %550 = vmatprep.subr.bf16.mxu0 %v302
    %551 = vmatpush1.bf16.msra.mxu0 %v301
    %552 = vmatprep.subr.bf16.mxu0 %v300
    %553 = vmatpush1.bf16.msra.mxu0 %v299
    %554 = vmatprep.subr.bf16.mxu0 0
    %555 = vmatpush2.bf16.msra.mxu0 0
    %556 = vmatprep.subr.bf16.mxu0 0
    %557 = vmatpush2.bf16.msra.mxu0 0
    %558 = vmatprep.subr.bf16.mxu0 0
    %559 = vmatpush2.bf16.msra.mxu0 0
    %560 = vmatprep.subr.bf16.mxu0 0
    %561 = vmatpush2.bf16.msra.mxu0 0
    %562 = vmatprep.subr.bf16.mxu0 0
    %563 = vmatpush2.bf16.msra.mxu0 0
    %564 = vmatprep.subr.bf16.mxu0 0
    %565 = vmatpush2.bf16.msra.mxu0 0
    %566 = vmatprep.subr.bf16.mxu0 0
    %567 = vmatpush2.bf16.msra.mxu0 0
    %568 = vmatprep.subr.bf16.mxu0 0
    %569 = vmatpush2.bf16.msra.mxu0 0
    %570 = vmatprep.mubr.bf16.mxu0 0
    %571 = vmatmul.mubr.bf16.gmra.mxu0 %v536
    %v572 = vpop.f32.mrf.mxu0
    %v573 = vadd.f32 0.0, %v572
    %v574 = vpop.f32.mrf.mxu0
    %v575 = vadd.f32 0.0, %v574
    %v576 = vpop.f32.mrf.mxu0
    %v577 = vpop.f32.mrf.mxu0
    %578 = vdwg.mxu0
    %v579 = vadd.f32 %v532, %v573
    %v580 = vadd.f32 %v533, %v575
    %v581 = vxor.u32 %v579, 2147483648
    %v582 = vxor.u32 %v580, 2147483648
    %v583 = vmul.f32 %v581, 1.442695
    %v584 = vpow.pop %v583
    %v585 = vmul.f32 %v582, 1.442695
    %v586 = vpow.pop %v585
    %v587 = vadd.f32 %v584, 1.0
    %v588 = vadd.f32 %v586, 1.0
    %v589 = vrcp.pop %v587
    %v590 = vmul.f32 1.0, %v589
    %v591 = vrcp.pop %v588
    %v592 = vmul.f32 1.0, %v591
    %v593 = vtanh.pop %v580
    %v594 = vmul.f32 %v590, %v495
    %596 = vrot.lane.b32.xlu0 %v593, 64
    %v597 = vpop.permute.xlu0 %596
    %v599 = vmul.f32 %v590, %v597
    %601 = vrot.lane.b32.xlu0 %v599, 64
    %v602 = vpop.permute.xlu0 %601
    %v604 = vadd.f32 %v594, %v602
    %v605 = vtanh.pop %v604
    %607 = vrot.lane.b32.xlu0 %v605, 64
    %v608 = vpop.permute.xlu0 %607
    %v610 = vmul.f32 %v592, %v608
    %s611 = scalar_lea.vmem [#allocation3], 4
    %612 = vst.msk [vmem:[%s611] sm:$0x3] %vm392, %v610
    %s613 = scalar_lea.vmem [#allocation3], 10
    %614 = vst.msk [vmem:[%s613] sm:$0x3] %vm395, %v610
    %s615 = scalar_lea.vmem [#allocation2], 12
    %v616 = vld [vmem:[%s615] sm:$0xf]
    %s617 = scalar_lea.vmem [#allocation2], 16
    %v618 = vld [vmem:[%s617] sm:$0xf]
    %v621 = vunpack.c.l.s4 1983009808
    %v622 = vunpack.c.0.s8 %v621
    %v623 = vlaneseq
    %v624 = vshrl.u32 %v623, 7
    %v625 = vsub.s32 %v622, %v624
    %v626 = vrot.slane %v616, %v625
    %v627 = vcombine.high %v626, %v626
    %v632 = vunpack.c.l.s4 1983009808
    %v633 = vunpack.c.0.s8 %v632
    %v634 = vlaneseq
    %v635 = vshrl.u32 %v634, 7
    %v636 = vsub.s32 %v633, %v635
    %v637 = vrot.slane %v618, %v636
    %v638 = vcombine.high %v637, %v637
    %v641 = vsel %vm108, %v626, %v637
    %v642 = vsel %vm109, %v627, %v638
    %v643 = vpack.c.bf16 %v610, %v610
    %v645 = vsel %vm315, %v643, 0
    %647 = vmatprep.subr.bf16.mxu0 0
    %648 = vmatpush1.bf16.msra.mxu0 0
    %649 = vmatprep.subr.bf16.mxu0 0
    %650 = vmatpush1.bf16.msra.mxu0 0
    %651 = vmatprep.subr.bf16.mxu0 0
    %652 = vmatpush1.bf16.msra.mxu0 0
    %653 = vmatprep.subr.bf16.mxu0 0
    %654 = vmatpush1.bf16.msra.mxu0 0
    %655 = vmatprep.subr.bf16.mxu0 %v306
    %656 = vmatpush1.bf16.msra.mxu0 %v305
    %657 = vmatprep.subr.bf16.mxu0 %v304
    %658 = vmatpush1.bf16.msra.mxu0 %v303
    %659 = vmatprep.subr.bf16.mxu0 %v302
    %660 = vmatpush1.bf16.msra.mxu0 %v301
    %661 = vmatprep.subr.bf16.mxu0 %v300
    %662 = vmatpush1.bf16.msra.mxu0 %v299
    %663 = vmatprep.subr.bf16.mxu0 0
    %664 = vmatpush2.bf16.msra.mxu0 0
    %665 = vmatprep.subr.bf16.mxu0 0
    %666 = vmatpush2.bf16.msra.mxu0 0
    %667 = vmatprep.subr.bf16.mxu0 0
    %668 = vmatpush2.bf16.msra.mxu0 0
    %669 = vmatprep.subr.bf16.mxu0 0
    %670 = vmatpush2.bf16.msra.mxu0 0
    %671 = vmatprep.subr.bf16.mxu0 0
    %672 = vmatpush2.bf16.msra.mxu0 0
    %673 = vmatprep.subr.bf16.mxu0 0
    %674 = vmatpush2.bf16.msra.mxu0 0
    %675 = vmatprep.subr.bf16.mxu0 0
    %676 = vmatpush2.bf16.msra.mxu0 0
    %677 = vmatprep.subr.bf16.mxu0 0
    %678 = vmatpush2.bf16.msra.mxu0 0
    %679 = vmatprep.mubr.bf16.mxu0 0
    %680 = vmatmul.mubr.bf16.gmra.mxu0 %v645
    %v681 = vpop.f32.mrf.mxu0
    %v682 = vadd.f32 0.0, %v681
    %v683 = vpop.f32.mrf.mxu0
    %v684 = vadd.f32 0.0, %v683
    %v685 = vpop.f32.mrf.mxu0
    %v686 = vpop.f32.mrf.mxu0
    %687 = vdwg.mxu0
    %v688 = vadd.f32 %v641, %v682
    %v689 = vadd.f32 %v642, %v684
    %v690 = vxor.u32 %v688, 2147483648
    %v691 = vxor.u32 %v689, 2147483648
    %v692 = vmul.f32 %v690, 1.442695
    %v693 = vpow.pop %v692
    %v694 = vmul.f32 %v691, 1.442695
    %v695 = vpow.pop %v694
    %v696 = vadd.f32 %v693, 1.0
    %v697 = vadd.f32 %v695, 1.0
    %v698 = vrcp.pop %v696
    %v699 = vmul.f32 1.0, %v698
    %v700 = vrcp.pop %v697
    %v701 = vmul.f32 1.0, %v700
    %v702 = vtanh.pop %v689
    %v703 = vmul.f32 %v699, %v604
    %705 = vrot.lane.b32.xlu0 %v702, 64
    %v706 = vpop.permute.xlu0 %705
    %v708 = vmul.f32 %v699, %v706
    %710 = vrot.lane.b32.xlu0 %v708, 64
    %v711 = vpop.permute.xlu0 %710
    %v713 = vadd.f32 %v703, %v711
    %v714 = vtanh.pop %v713
    %716 = vrot.lane.b32.xlu0 %v714, 64
    %v717 = vpop.permute.xlu0 %716
    %v719 = vmul.f32 %v701, %v717
    %s720 = scalar_lea.vmem [#allocation3], 6
    %721 = vst.msk [vmem:[%s720] sm:$0x3] %vm392, %v719
    %s722 = scalar_lea.vmem [#allocation3], 8
    %723 = vst.msk [vmem:[%s722] sm:$0x3] %vm395, %v719
    %v724 = vld [vmem:[%s617] sm:$0xf]
    %v725 = vld [vmem:[%s615] sm:$0xf]
    %v728 = vunpack.c.l.s4 1983009808
    %v729 = vunpack.c.0.s8 %v728
    %v730 = vlaneseq
    %v731 = vshrl.u32 %v730, 7
    %v732 = vsub.s32 %v729, %v731
    %v733 = vrot.slane %v724, %v732
    %v734 = vcombine.high %v733, %v733
    %v739 = vunpack.c.l.s4 1983009808
    %v740 = vunpack.c.0.s8 %v739
    %v741 = vlaneseq
    %v742 = vshrl.u32 %v741, 7
    %v743 = vsub.s32 %v740, %v742
    %v744 = vrot.slane %v725, %v743
    %v745 = vcombine.high %v744, %v744
    %v748 = vsel %vm108, %v733, %v744
    %v749 = vsel %vm109, %v734, %v745
    %v750 = vpack.c.bf16 %v719, %v719
    %v752 = vsel %vm315, %v750, 0
    %754 = vmatprep.subr.bf16.mxu0 0
    %755 = vmatpush1.bf16.msra.mxu0 0
    %756 = vmatprep.subr.bf16.mxu0 0
    %757 = vmatpush1.bf16.msra.mxu0 0
    %758 = vmatprep.subr.bf16.mxu0 0
    %759 = vmatpush1.bf16.msra.mxu0 0
    %760 = vmatprep.subr.bf16.mxu0 0
    %761 = vmatpush1.bf16.msra.mxu0 0
    %762 = vmatprep.subr.bf16.mxu0 %v306
    %763 = vmatpush1.bf16.msra.mxu0 %v305
    %764 = vmatprep.subr.bf16.mxu0 %v304
    %765 = vmatpush1.bf16.msra.mxu0 %v303
    %766 = vmatprep.subr.bf16.mxu0 %v302
    %767 = vmatpush1.bf16.msra.mxu0 %v301
    %768 = vmatprep.subr.bf16.mxu0 %v300
    %769 = vmatpush1.bf16.msra.mxu0 %v299
    %770 = vmatprep.subr.bf16.mxu0 0
    %771 = vmatpush2.bf16.msra.mxu0 0
    %772 = vmatprep.subr.bf16.mxu0 0
    %773 = vmatpush2.bf16.msra.mxu0 0
    %774 = vmatprep.subr.bf16.mxu0 0
    %775 = vmatpush2.bf16.msra.mxu0 0
    %776 = vmatprep.subr.bf16.mxu0 0
    %777 = vmatpush2.bf16.msra.mxu0 0
    %778 = vmatprep.subr.bf16.mxu0 0
    %779 = vmatpush2.bf16.msra.mxu0 0
    %780 = vmatprep.subr.bf16.mxu0 0
    %781 = vmatpush2.bf16.msra.mxu0 0
    %782 = vmatprep.subr.bf16.mxu0 0
    %783 = vmatpush2.bf16.msra.mxu0 0
    %784 = vmatprep.subr.bf16.mxu0 0
    %785 = vmatpush2.bf16.msra.mxu0 0
    %786 = vmatprep.mubr.bf16.mxu0 0
    %787 = vmatmul.mubr.bf16.gmra.mxu0 %v752
    %v788 = vpop.f32.mrf.mxu0
    %v789 = vadd.f32 0.0, %v788
    %v790 = vpop.f32.mrf.mxu0
    %v791 = vadd.f32 0.0, %v790
    %v792 = vpop.f32.mrf.mxu0
    %v793 = vpop.f32.mrf.mxu0
    %794 = vdwg.mxu0
    %v795 = vadd.f32 %v748, %v789
    %v796 = vadd.f32 %v749, %v791
    %v797 = vxor.u32 %v795, 2147483648
    %v798 = vxor.u32 %v796, 2147483648
    %v799 = vmul.f32 %v797, 1.442695
    %v800 = vpow.pop %v799
    %v801 = vmul.f32 %v798, 1.442695
    %v802 = vpow.pop %v801
    %v803 = vadd.f32 %v800, 1.0
    %v804 = vadd.f32 %v802, 1.0
    %v805 = vrcp.pop %v803
    %v806 = vmul.f32 1.0, %v805
    %v807 = vrcp.pop %v804
    %v808 = vmul.f32 1.0, %v807
    %v809 = vtanh.pop %v796
    %v810 = vmul.f32 %v806, %v713
    %812 = vrot.lane.b32.xlu0 %v809, 64
    %v813 = vpop.permute.xlu0 %812
    %v815 = vmul.f32 %v806, %v813
    %817 = vrot.lane.b32.xlu0 %v815, 64
    %v818 = vpop.permute.xlu0 %817
    %v820 = vadd.f32 %v810, %v818
    %v821 = vtanh.pop %v820
    %823 = vrot.lane.b32.xlu0 %v821, 64
    %v824 = vpop.permute.xlu0 %823
    %v826 = vmul.f32 %v808, %v824
    %827 = vst.msk [vmem:[%s722] sm:$0x3] %vm392, %v826
    %828 = vst.msk [vmem:[%s720] sm:$0x3] %vm395, %v826
    %v829 = vld [vmem:[%s508] sm:$0xf]
    %v830 = vld [vmem:[%s506] sm:$0xf]
    %v833 = vunpack.c.l.s4 1983009808
    %v834 = vunpack.c.0.s8 %v833
    %v835 = vlaneseq
    %v836 = vshrl.u32 %v835, 7
    %v837 = vsub.s32 %v834, %v836
    %v838 = vrot.slane %v829, %v837
    %v839 = vcombine.high %v838, %v838
    %v844 = vunpack.c.l.s4 1983009808
    %v845 = vunpack.c.0.s8 %v844
    %v846 = vlaneseq
    %v847 = vshrl.u32 %v846, 7
    %v848 = vsub.s32 %v845, %v847
    %v849 = vrot.slane %v830, %v848
    %v850 = vcombine.high %v849, %v849
    %v853 = vsel %vm108, %v838, %v849
    %v854 = vsel %vm109, %v839, %v850
    %v855 = vpack.c.bf16 %v826, %v826
    %v857 = vsel %vm315, %v855, 0
    %859 = vmatprep.subr.bf16.mxu0 0
    %860 = vmatpush1.bf16.msra.mxu0 0
    %861 = vmatprep.subr.bf16.mxu0 0
    %862 = vmatpush1.bf16.msra.mxu0 0
    %863 = vmatprep.subr.bf16.mxu0 0
    %864 = vmatpush1.bf16.msra.mxu0 0
    %865 = vmatprep.subr.bf16.mxu0 0
    %866 = vmatpush1.bf16.msra.mxu0 0
    %867 = vmatprep.subr.bf16.mxu0 %v306
    %868 = vmatpush1.bf16.msra.mxu0 %v305
    %869 = vmatprep.subr.bf16.mxu0 %v304
    %870 = vmatpush1.bf16.msra.mxu0 %v303
    %871 = vmatprep.subr.bf16.mxu0 %v302
    %872 = vmatpush1.bf16.msra.mxu0 %v301
    %873 = vmatprep.subr.bf16.mxu0 %v300
    %874 = vmatpush1.bf16.msra.mxu0 %v299
    %875 = vmatprep.subr.bf16.mxu0 0
    %876 = vmatpush2.bf16.msra.mxu0 0
    %877 = vmatprep.subr.bf16.mxu0 0
    %878 = vmatpush2.bf16.msra.mxu0 0
    %879 = vmatprep.subr.bf16.mxu0 0
    %880 = vmatpush2.bf16.msra.mxu0 0
    %881 = vmatprep.subr.bf16.mxu0 0
    %882 = vmatpush2.bf16.msra.mxu0 0
    %883 = vmatprep.subr.bf16.mxu0 0
    %884 = vmatpush2.bf16.msra.mxu0 0
    %885 = vmatprep.subr.bf16.mxu0 0
    %886 = vmatpush2.bf16.msra.mxu0 0
    %887 = vmatprep.subr.bf16.mxu0 0
    %888 = vmatpush2.bf16.msra.mxu0 0
    %889 = vmatprep.subr.bf16.mxu0 0
    %890 = vmatpush2.bf16.msra.mxu0 0
    %891 = vmatprep.mubr.bf16.mxu0 0
    %892 = vmatmul.mubr.bf16.gmra.mxu0 %v857
    %v893 = vpop.f32.mrf.mxu0
    %v894 = vadd.f32 0.0, %v893
    %v895 = vpop.f32.mrf.mxu0
    %v896 = vadd.f32 0.0, %v895
    %v897 = vpop.f32.mrf.mxu0
    %v898 = vpop.f32.mrf.mxu0
    %899 = vdwg.mxu0
    %v900 = vadd.f32 %v853, %v894
    %v901 = vadd.f32 %v854, %v896
    %v902 = vxor.u32 %v900, 2147483648
    %v903 = vxor.u32 %v901, 2147483648
    %v904 = vmul.f32 %v902, 1.442695
    %v905 = vpow.pop %v904
    %v906 = vmul.f32 %v903, 1.442695
    %v907 = vpow.pop %v906
    %v908 = vadd.f32 %v905, 1.0
    %v909 = vadd.f32 %v907, 1.0
    %v910 = vrcp.pop %v908
    %v911 = vmul.f32 1.0, %v910
    %v912 = vrcp.pop %v909
    %v913 = vmul.f32 1.0, %v912
    %v914 = vtanh.pop %v901
    %v915 = vmul.f32 %v911, %v820
    %917 = vrot.lane.b32.xlu0 %v914, 64
    %v918 = vpop.permute.xlu0 %917
    %v920 = vmul.f32 %v911, %v918
    %922 = vrot.lane.b32.xlu0 %v920, 64
    %v923 = vpop.permute.xlu0 %922
    %v925 = vadd.f32 %v915, %v923
    %v926 = vtanh.pop %v925
    %928 = vrot.lane.b32.xlu0 %v926, 64
    %v929 = vpop.permute.xlu0 %928
    %v931 = vmul.f32 %v913, %v929
    %932 = vst.msk [vmem:[%s613] sm:$0x3] %vm392, %v931
    %933 = vst.msk [vmem:[%s611] sm:$0x3] %vm395, %v931
    %v934 = vld [vmem:[%s399] sm:$0xf]
    %v935 = vld [vmem:[%s397] sm:$0xf]
    %v938 = vunpack.c.l.s4 1983009808
    %v939 = vunpack.c.0.s8 %v938
    %v940 = vlaneseq
    %v941 = vshrl.u32 %v940, 7
    %v942 = vsub.s32 %v939, %v941
    %v943 = vrot.slane %v934, %v942
    %v944 = vcombine.high %v943, %v943
    %v949 = vunpack.c.l.s4 1983009808
    %v950 = vunpack.c.0.s8 %v949
    %v951 = vlaneseq
    %v952 = vshrl.u32 %v951, 7
    %v953 = vsub.s32 %v950, %v952
    %v954 = vrot.slane %v935, %v953
    %v955 = vcombine.high %v954, %v954
    %v958 = vsel %vm108, %v943, %v954
    %v959 = vsel %vm109, %v944, %v955
    %v960 = vpack.c.bf16 %v931, %v931
    %v962 = vsel %vm315, %v960, 0
    %964 = vmatprep.subr.bf16.mxu0 0
    %965 = vmatpush1.bf16.msra.mxu0 0
    %966 = vmatprep.subr.bf16.mxu0 0
    %967 = vmatpush1.bf16.msra.mxu0 0
    %968 = vmatprep.subr.bf16.mxu0 0
    %969 = vmatpush1.bf16.msra.mxu0 0
    %970 = vmatprep.subr.bf16.mxu0 0
    %971 = vmatpush1.bf16.msra.mxu0 0
    %972 = vmatprep.subr.bf16.mxu0 %v306
    %973 = vmatpush1.bf16.msra.mxu0 %v305
    %974 = vmatprep.subr.bf16.mxu0 %v304
    %975 = vmatpush1.bf16.msra.mxu0 %v303
    %976 = vmatprep.subr.bf16.mxu0 %v302
    %977 = vmatpush1.bf16.msra.mxu0 %v301
    %978 = vmatprep.subr.bf16.mxu0 %v300
    %979 = vmatpush1.bf16.msra.mxu0 %v299
    %980 = vmatprep.subr.bf16.mxu0 0
    %981 = vmatpush2.bf16.msra.mxu0 0
    %982 = vmatprep.subr.bf16.mxu0 0
    %983 = vmatpush2.bf16.msra.mxu0 0
    %984 = vmatprep.subr.bf16.mxu0 0
    %985 = vmatpush2.bf16.msra.mxu0 0
    %986 = vmatprep.subr.bf16.mxu0 0
    %987 = vmatpush2.bf16.msra.mxu0 0
    %988 = vmatprep.subr.bf16.mxu0 0
    %989 = vmatpush2.bf16.msra.mxu0 0
    %990 = vmatprep.subr.bf16.mxu0 0
    %991 = vmatpush2.bf16.msra.mxu0 0
    %992 = vmatprep.subr.bf16.mxu0 0
    %993 = vmatpush2.bf16.msra.mxu0 0
    %994 = vmatprep.subr.bf16.mxu0 0
    %995 = vmatpush2.bf16.msra.mxu0 0
    %996 = vmatprep.mubr.bf16.mxu0 0
    %997 = vmatmul.mubr.bf16.gmra.mxu0 %v962
    %v998 = vpop.f32.mrf.mxu0
    %v999 = vadd.f32 0.0, %v998
    %v1000 = vpop.f32.mrf.mxu0
    %v1001 = vadd.f32 0.0, %v1000
    %v1002 = vpop.f32.mrf.mxu0
    %v1003 = vpop.f32.mrf.mxu0
    %1004 = vdwg.mxu0
    %v1005 = vadd.f32 %v958, %v999
    %v1006 = vadd.f32 %v959, %v1001
    %v1007 = vxor.u32 %v1005, 2147483648
    %v1008 = vxor.u32 %v1006, 2147483648
    %v1009 = vmul.f32 %v1007, 1.442695
    %v1010 = vpow.pop %v1009
    %v1011 = vmul.f32 %v1008, 1.442695
    %v1012 = vpow.pop %v1011
    %v1013 = vadd.f32 %v1010, 1.0
    %v1014 = vadd.f32 %v1012, 1.0
    %v1015 = vrcp.pop %v1013
    %v1016 = vmul.f32 1.0, %v1015
    %v1017 = vrcp.pop %v1014
    %v1018 = vmul.f32 1.0, %v1017
    %v1019 = vtanh.pop %v1006
    %v1020 = vmul.f32 %v1016, %v925
    %1022 = vrot.lane.b32.xlu0 %v1019, 64
    %v1023 = vpop.permute.xlu0 %1022
    %v1025 = vmul.f32 %v1016, %v1023
    %1027 = vrot.lane.b32.xlu0 %v1025, 64
    %v1028 = vpop.permute.xlu0 %1027
    %v1030 = vadd.f32 %v1020, %v1028
    %v1031 = vtanh.pop %v1030
    %1033 = vrot.lane.b32.xlu0 %v1031, 64
    %v1034 = vpop.permute.xlu0 %1033
    %v1036 = vmul.f32 %v1018, %v1034
    %1037 = vst.msk [vmem:[%s504] sm:$0x3] %vm392, %v1036
    %1038 = vst.msk [vmem:[%s502] sm:$0x3] %vm395, %v1036
    %v1039 = vld [vmem:[%s249] sm:$0xf]
    %v1040 = vld [vmem:[#allocation2] sm:$0xf]
    %v1043 = vunpack.c.l.s4 1983009808
    %v1044 = vunpack.c.0.s8 %v1043
    %v1045 = vlaneseq
    %v1046 = vshrl.u32 %v1045, 7
    %v1047 = vsub.s32 %v1044, %v1046
    %v1048 = vrot.slane %v1039, %v1047
    %v1049 = vcombine.high %v1048, %v1048
    %v1054 = vunpack.c.l.s4 1983009808
    %v1055 = vunpack.c.0.s8 %v1054
    %v1056 = vlaneseq
    %v1057 = vshrl.u32 %v1056, 7
    %v1058 = vsub.s32 %v1055, %v1057
    %v1059 = vrot.slane %v1040, %v1058
    %v1060 = vcombine.high %v1059, %v1059
    %v1063 = vsel %vm108, %v1048, %v1059
    %v1064 = vsel %vm109, %v1049, %v1060
    %v1065 = vpack.c.bf16 %v1036, %v1036
    %v1067 = vsel %vm315, %v1065, 0
    %1069 = vmatprep.subr.bf16.mxu0 0
    %1070 = vmatpush1.bf16.msra.mxu0 0
    %1071 = vmatprep.subr.bf16.mxu0 0
    %1072 = vmatpush1.bf16.msra.mxu0 0
    %1073 = vmatprep.subr.bf16.mxu0 0
    %1074 = vmatpush1.bf16.msra.mxu0 0
    %1075 = vmatprep.subr.bf16.mxu0 0
    %1076 = vmatpush1.bf16.msra.mxu0 0
    %1077 = vmatprep.subr.bf16.mxu0 %v306
    %1078 = vmatpush1.bf16.msra.mxu0 %v305
    %1079 = vmatprep.subr.bf16.mxu0 %v304
    %1080 = vmatpush1.bf16.msra.mxu0 %v303
    %1081 = vmatprep.subr.bf16.mxu0 %v302
    %1082 = vmatpush1.bf16.msra.mxu0 %v301
    %1083 = vmatprep.subr.bf16.mxu0 %v300
    %1084 = vmatpush1.bf16.msra.mxu0 %v299
    %1085 = vmatprep.subr.bf16.mxu0 0
    %1086 = vmatpush2.bf16.msra.mxu0 0
    %1087 = vmatprep.subr.bf16.mxu0 0
    %1088 = vmatpush2.bf16.msra.mxu0 0
    %1089 = vmatprep.subr.bf16.mxu0 0
    %1090 = vmatpush2.bf16.msra.mxu0 0
    %1091 = vmatprep.subr.bf16.mxu0 0
    %1092 = vmatpush2.bf16.msra.mxu0 0
    %1093 = vmatprep.subr.bf16.mxu0 0
    %1094 = vmatpush2.bf16.msra.mxu0 0
    %1095 = vmatprep.subr.bf16.mxu0 0
    %1096 = vmatpush2.bf16.msra.mxu0 0
    %1097 = vmatprep.subr.bf16.mxu0 0
    %1098 = vmatpush2.bf16.msra.mxu0 0
    %1099 = vmatprep.subr.bf16.mxu0 0
    %1100 = vmatpush2.bf16.msra.mxu0 0
    %1101 = vmatprep.mubr.bf16.mxu0 0
    %1102 = vmatmul.mubr.bf16.gmra.mxu0 %v1067
    %v1103 = vpop.f32.mrf.mxu0
    %v1104 = vadd.f32 0.0, %v1103
    %v1105 = vpop.f32.mrf.mxu0
    %v1106 = vadd.f32 0.0, %v1105
    %v1107 = vpop.f32.mrf.mxu0
    %v1108 = vpop.f32.mrf.mxu0
    %1109 = vdwg.mxu0
    %v1110 = vadd.f32 %v1063, %v1104
    %v1111 = vadd.f32 %v1064, %v1106
    %v1112 = vxor.u32 %v1110, 2147483648
    %v1113 = vxor.u32 %v1111, 2147483648
    %v1114 = vmul.f32 %v1112, 1.442695
    %v1115 = vpow.pop %v1114
    %v1116 = vmul.f32 %v1113, 1.442695
    %v1117 = vpow.pop %v1116
    %v1118 = vadd.f32 %v1115, 1.0
    %v1119 = vadd.f32 %v1117, 1.0
    %v1120 = vrcp.pop %v1118
    %v1121 = vmul.f32 1.0, %v1120
    %v1122 = vrcp.pop %v1119
    %v1123 = vmul.f32 1.0, %v1122
    %v1124 = vtanh.pop %v1111
    %v1125 = vmul.f32 %v1121, %v1030
    %1127 = vrot.lane.b32.xlu0 %v1124, 64
    %v1128 = vpop.permute.xlu0 %1127
    %v1130 = vmul.f32 %v1121, %v1128
    %1132 = vrot.lane.b32.xlu0 %v1130, 64
    %v1133 = vpop.permute.xlu0 %1132
    %v1135 = vadd.f32 %v1125, %v1133
    %v1136 = vtanh.pop %v1135
    %1138 = vrot.lane.b32.xlu0 %v1136, 64
    %v1139 = vpop.permute.xlu0 %1138
    %v1141 = vmul.f32 %v1123, %v1139
    %1142 = vst.msk [vmem:[%s394] sm:$0x3] %vm392, %v1141
    %1143 = vst.msk [vmem:[#allocation3] sm:$0x3] %vm395, %v1141
    %v1144 = vld [vmem:[#allocation3] sm:$0x3]
    %v1145 = vld [vmem:[#allocation3 + $0x2] sm:$0x3]
    %v1146 = vld [vmem:[#allocation3 + $0x4] sm:$0x3]
    %v1147 = vld [vmem:[#allocation3 + $0x6] sm:$0x3]
    %v1148 = vld [vmem:[#allocation3 + $0x8] sm:$0x3]
    %v1149 = vld [vmem:[#allocation3 + $0xa] sm:$0x3]
    %v1150 = vld [vmem:[#allocation3 + $0xc] sm:$0x3]
    %v1151 = vld [vmem:[#allocation3 + $0xe] sm:$0x3]
    %v1160 = vcombine.low %v1144, %v1145
    %v1161 = vcombine.low %v1146, %v1147
    %v1163 = vunpack.c.l.s4 1983009808
    %v1164 = vunpack.c.0.s8 %v1163
    %v1165 = vlaneseq
    %v1166 = vshrl.u32 %v1165, 7
    %v1167 = vsub.s32 %v1164, %v1166
    %v1168 = vrot.slane %v1160, %v1167
    %v1170 = vunpack.c.l.s4 1983009808
    %v1171 = vunpack.c.0.s8 %v1170
    %v1172 = vlaneseq
    %v1173 = vshrl.u32 %v1172, 7
    %v1174 = vsub.s32 %v1171, %v1173
    %v1175 = vrot.slane %v1161, %v1174
    %v1176 = vcombine.low %v1168, %v1175
    %v1177 = vcombine.low %v1148, %v1149
    %v1178 = vcombine.low %v1150, %v1151
    %v1180 = vunpack.c.l.s4 1983009808
    %v1181 = vunpack.c.0.s8 %v1180
    %v1182 = vlaneseq
    %v1183 = vshrl.u32 %v1182, 7
    %v1184 = vsub.s32 %v1181, %v1183
    %v1185 = vrot.slane %v1177, %v1184
    %v1187 = vunpack.c.l.s4 1983009808
    %v1188 = vunpack.c.0.s8 %v1187
    %v1189 = vlaneseq
    %v1190 = vshrl.u32 %v1189, 7
    %v1191 = vsub.s32 %v1188, %v1190
    %v1192 = vrot.slane %v1178, %v1191
    %v1193 = vcombine.low %v1185, %v1192
    %v1196 = vpack.c.bf16 %v1193, %v1176
    %v1197 = vld [vmem:[#allocation7] sm:$0xff]
    %v1198 = vld [vmem:[#allocation7 + $0x8] sm:$0xff]
    %v1199 = vld [vmem:[#allocation7 + $0x10] sm:$0xff]
    %v1200 = vld [vmem:[#allocation7 + $0x18] sm:$0xff]
    %v1201 = vld [vmem:[#allocation7 + $0x20] sm:$0xff]
    %v1202 = vld [vmem:[#allocation7 + $0x28] sm:$0xff]
    %v1203 = vld [vmem:[#allocation7 + $0x30] sm:$0xff]
    %v1204 = vld [vmem:[#allocation7 + $0x38] sm:$0xff]
    %v1205 = vld [vmem:[%s5] sm:$0x3]
    %v1207 = vlaneseq
    %v1208 = vshrl.u32 %v1207, 7
    %v1209 = vsub.s32 0, %v1208
    %v1210 = vrot.slane %v1205, %v1209
    %v1211 = vlaneseq
    %v1212 = vshrl.u32 %v1211, 7
    %v1213 = vsub.s32 1, %v1212
    %v1214 = vrot.slane %v1205, %v1213
    %v1225 = vunpack.c.l.b16 %v1197
    %v1226 = vunpack.c.h.b16 %v1197
    %v1227 = vunpack.c.l.b16 %v1198
    %v1228 = vunpack.c.h.b16 %v1198
    %v1229 = vunpack.c.l.b16 %v1199
    %v1230 = vunpack.c.h.b16 %v1199
    %v1231 = vunpack.c.l.b16 %v1200
    %v1232 = vunpack.c.h.b16 %v1200
    %v1233 = vunpack.c.l.b16 %v1201
    %v1234 = vunpack.c.h.b16 %v1201
    %v1235 = vunpack.c.l.b16 %v1202
    %v1236 = vunpack.c.h.b16 %v1202
    %v1237 = vunpack.c.l.b16 %v1203
    %v1238 = vunpack.c.h.b16 %v1203
    %v1239 = vunpack.c.l.b16 %v1204
    %v1240 = vunpack.c.h.b16 %v1204
    %v1241 = vpack.c.b16 %v1227, %v1225
    %v1242 = vpack.c.b16 %v1228, %v1226
    %v1243 = vpack.c.b16 %v1231, %v1229
    %v1244 = vpack.c.b16 %v1232, %v1230
    %v1245 = vpack.c.b16 %v1235, %v1233
    %v1246 = vpack.c.b16 %v1236, %v1234
    %v1247 = vpack.c.b16 %v1239, %v1237
    %v1248 = vpack.c.b16 %v1240, %v1238
    %v1258 = vsel %vm315, %v1196, 0
    %1260 = vmatprep.subr.bf16.mxu0 0
    %1261 = vmatpush1.bf16.msra.mxu0 0
    %1262 = vmatprep.subr.bf16.mxu0 0
    %1263 = vmatpush1.bf16.msra.mxu0 0
    %1264 = vmatprep.subr.bf16.mxu0 0
    %1265 = vmatpush1.bf16.msra.mxu0 0
    %1266 = vmatprep.subr.bf16.mxu0 0
    %1267 = vmatpush1.bf16.msra.mxu0 0
    %1268 = vmatprep.subr.bf16.mxu0 %v1248
    %1269 = vmatpush1.bf16.msra.mxu0 %v1247
    %1270 = vmatprep.subr.bf16.mxu0 %v1246
    %1271 = vmatpush1.bf16.msra.mxu0 %v1245
    %1272 = vmatprep.subr.bf16.mxu0 %v1244
    %1273 = vmatpush1.bf16.msra.mxu0 %v1243
    %1274 = vmatprep.subr.bf16.mxu0 %v1242
    %1275 = vmatpush1.bf16.msra.mxu0 %v1241
    %1276 = vmatprep.subr.bf16.mxu0 0
    %1277 = vmatpush2.bf16.msra.mxu0 0
    %1278 = vmatprep.subr.bf16.mxu0 0
    %1279 = vmatpush2.bf16.msra.mxu0 0
    %1280 = vmatprep.subr.bf16.mxu0 0
    %1281 = vmatpush2.bf16.msra.mxu0 0
    %1282 = vmatprep.subr.bf16.mxu0 0
    %1283 = vmatpush2.bf16.msra.mxu0 0
    %1284 = vmatprep.subr.bf16.mxu0 0
    %1285 = vmatpush2.bf16.msra.mxu0 0
    %1286 = vmatprep.subr.bf16.mxu0 0
    %1287 = vmatpush2.bf16.msra.mxu0 0
    %1288 = vmatprep.subr.bf16.mxu0 0
    %1289 = vmatpush2.bf16.msra.mxu0 0
    %1290 = vmatprep.subr.bf16.mxu0 0
    %1291 = vmatpush2.bf16.msra.mxu0 0
    %1292 = vmatprep.mubr.bf16.mxu0 0
    %1293 = vmatmul.mubr.bf16.gmra.mxu0 %v1258
    %v1294 = vpop.f32.mrf.mxu0
    %v1295 = vadd.f32 %v1210, %v1294
    %v1296 = vpop.f32.mrf.mxu0
    %v1297 = vadd.f32 %v1214, %v1296
    %v1298 = vpop.f32.mrf.mxu0
    %v1299 = vadd.f32 %v1210, %v1298
    %v1300 = vpop.f32.mrf.mxu0
    %v1301 = vadd.f32 %v1214, %v1300
    %1302 = vdwg.mxu0
    %v1307 = vcombine.low %v1295, %v1297
    %v1308 = vcombine.high %v1295, %v1297
    %v1310 = vunpack.c.l.s4 1983009808
    %v1311 = vunpack.c.0.s8 %v1310
    %v1312 = vlaneseq
    %v1313 = vshrl.u32 %v1312, 7
    %v1314 = vsub.s32 %v1311, %v1313
    %v1315 = vrot.slane %v1307, %v1314
    %v1317 = vunpack.c.l.s4 1983009808
    %v1318 = vunpack.c.0.s8 %v1317
    %v1319 = vlaneseq
    %v1320 = vshrl.u32 %v1319, 7
    %v1321 = vsub.s32 %v1318, %v1320
    %v1322 = vrot.slane %v1308, %v1321
    %v1323 = vcombine.high %v1315, %v1315
    %v1324 = vcombine.high %v1322, %v1322
    %v1325 = vcombine.low %v1299, %v1301
    %v1326 = vcombine.high %v1299, %v1301
    %v1328 = vunpack.c.l.s4 1983009808
    %v1329 = vunpack.c.0.s8 %v1328
    %v1330 = vlaneseq
    %v1331 = vshrl.u32 %v1330, 7
    %v1332 = vsub.s32 %v1329, %v1331
    %v1333 = vrot.slane %v1325, %v1332
    %v1335 = vunpack.c.l.s4 1983009808
    %v1336 = vunpack.c.0.s8 %v1335
    %v1337 = vlaneseq
    %v1338 = vshrl.u32 %v1337, 7
    %v1339 = vsub.s32 %v1336, %v1338
    %v1340 = vrot.slane %v1326, %v1339
    %v1341 = vcombine.high %v1333, %v1333
    %v1342 = vcombine.high %v1340, %v1340
    %1351 = vst [vmem:[#allocation2] sm:$0xf] %v1315
    %1352 = vst [vmem:[#allocation2 + $0x4] sm:$0xf] %v1323
    %1353 = vst [vmem:[#allocation2 + $0x8] sm:$0xf] %v1322
    %1354 = vst [vmem:[#allocation2 + $0xc] sm:$0xf] %v1324
    %1355 = vst [vmem:[#allocation2 + $0x10] sm:$0xf] %v1333
    %1356 = vst [vmem:[#allocation2 + $0x14] sm:$0xf] %v1341
    %1357 = vst [vmem:[#allocation2 + $0x18] sm:$0xf] %v1340
    %1358 = vst [vmem:[#allocation2 + $0x1c] sm:$0xf] %v1342
    %v1359 = vld [vmem:[#allocation9] sm:$0xff]
    %v1360 = vld [vmem:[#allocation9 + $0x8] sm:$0xff]
    %v1361 = vld [vmem:[#allocation9 + $0x10] sm:$0xff]
    %v1362 = vld [vmem:[#allocation9 + $0x18] sm:$0xff]
    %v1363 = vld [vmem:[#allocation9 + $0x20] sm:$0xff]
    %v1364 = vld [vmem:[#allocation9 + $0x28] sm:$0xff]
    %v1365 = vld [vmem:[#allocation9 + $0x30] sm:$0xff]
    %v1366 = vld [vmem:[#allocation9 + $0x38] sm:$0xff]
    %v1367 = vld [vmem:[#allocation2] sm:$0xf]
    %v1368 = vld [vmem:[%s249] sm:$0xf]
    %v1371 = vunpack.c.l.s4 1983009808
    %v1372 = vunpack.c.0.s8 %v1371
    %v1373 = vlaneseq
    %v1374 = vshrl.u32 %v1373, 7
    %v1375 = vsub.s32 %v1372, %v1374
    %v1376 = vrot.slane %v1367, %v1375
    %v1377 = vcombine.high %v1376, %v1376
    %v1382 = vunpack.c.l.s4 1983009808
    %v1383 = vunpack.c.0.s8 %v1382
    %v1384 = vlaneseq
    %v1385 = vshrl.u32 %v1384, 7
    %v1386 = vsub.s32 %v1383, %v1385
    %v1387 = vrot.slane %v1368, %v1386
    %v1388 = vcombine.high %v1387, %v1387
    %v1391 = vsel %vm108, %v1376, %v1387
    %v1392 = vsel %vm109, %v1377, %v1388
    %v1401 = vunpack.c.l.b16 %v1359
    %v1402 = vunpack.c.h.b16 %v1359
    %v1403 = vunpack.c.l.b16 %v1360
    %v1404 = vunpack.c.h.b16 %v1360
    %v1405 = vunpack.c.l.b16 %v1361
    %v1406 = vunpack.c.h.b16 %v1361
    %v1407 = vunpack.c.l.b16 %v1362
    %v1408 = vunpack.c.h.b16 %v1362
    %v1409 = vunpack.c.l.b16 %v1363
    %v1410 = vunpack.c.h.b16 %v1363
    %v1411 = vunpack.c.l.b16 %v1364
    %v1412 = vunpack.c.h.b16 %v1364
    %v1413 = vunpack.c.l.b16 %v1365
    %v1414 = vunpack.c.h.b16 %v1365
    %v1415 = vunpack.c.l.b16 %v1366
    %v1416 = vunpack.c.h.b16 %v1366
    %v1417 = vpack.c.b16 %v1403, %v1401
    %v1418 = vpack.c.b16 %v1404, %v1402
    %v1419 = vpack.c.b16 %v1407, %v1405
    %v1420 = vpack.c.b16 %v1408, %v1406
    %v1421 = vpack.c.b16 %v1411, %v1409
    %v1422 = vpack.c.b16 %v1412, %v1410
    %v1423 = vpack.c.b16 %v1415, %v1413
    %v1424 = vpack.c.b16 %v1416, %v1414
    %1433 = vmatprep.subr.bf16.mxu0 0
    %1434 = vmatpush1.bf16.msra.mxu0 0
    %1435 = vmatprep.subr.bf16.mxu0 0
    %1436 = vmatpush1.bf16.msra.mxu0 0
    %1437 = vmatprep.subr.bf16.mxu0 0
    %1438 = vmatpush1.bf16.msra.mxu0 0
    %1439 = vmatprep.subr.bf16.mxu0 0
    %1440 = vmatpush1.bf16.msra.mxu0 0
    %1441 = vmatprep.subr.bf16.mxu0 %v1424
    %1442 = vmatpush1.bf16.msra.mxu0 %v1423
    %1443 = vmatprep.subr.bf16.mxu0 %v1422
    %1444 = vmatpush1.bf16.msra.mxu0 %v1421
    %1445 = vmatprep.subr.bf16.mxu0 %v1420
    %1446 = vmatpush1.bf16.msra.mxu0 %v1419
    %1447 = vmatprep.subr.bf16.mxu0 %v1418
    %1448 = vmatpush1.bf16.msra.mxu0 %v1417
    %1449 = vmatprep.subr.bf16.mxu0 0
    %1450 = vmatpush2.bf16.msra.mxu0 0
    %1451 = vmatprep.subr.bf16.mxu0 0
    %1452 = vmatpush2.bf16.msra.mxu0 0
    %1453 = vmatprep.subr.bf16.mxu0 0
    %1454 = vmatpush2.bf16.msra.mxu0 0
    %1455 = vmatprep.subr.bf16.mxu0 0
    %1456 = vmatpush2.bf16.msra.mxu0 0
    %1457 = vmatprep.subr.bf16.mxu0 0
    %1458 = vmatpush2.bf16.msra.mxu0 0
    %1459 = vmatprep.subr.bf16.mxu0 0
    %1460 = vmatpush2.bf16.msra.mxu0 0
    %1461 = vmatprep.subr.bf16.mxu0 0
    %1462 = vmatpush2.bf16.msra.mxu0 0
    %1463 = vmatprep.subr.bf16.mxu0 0
    %1464 = vmatpush2.bf16.msra.mxu0 0
    %1465 = vmatprep.mubr.bf16.mxu0 0
    %1466 = vmatmul.mubr.bf16.gmra.mxu0 %v317
    %v1467 = vpop.f32.mrf.mxu0
    %v1468 = vadd.f32 0.0, %v1467
    %v1469 = vpop.f32.mrf.mxu0
    %v1470 = vadd.f32 0.0, %v1469
    %v1471 = vpop.f32.mrf.mxu0
    %v1472 = vpop.f32.mrf.mxu0
    %1473 = vdwg.mxu0
    %v1474 = vadd.f32 %v1391, %v1468
    %v1475 = vadd.f32 %v1392, %v1470
    %v1476 = vxor.u32 %v1474, 2147483648
    %v1477 = vxor.u32 %v1475, 2147483648
    %v1478 = vmul.f32 %v1476, 1.442695
    %v1479 = vpow.pop %v1478
    %v1480 = vmul.f32 %v1477, 1.442695
    %v1481 = vpow.pop %v1480
    %v1482 = vadd.f32 %v1479, 1.0
    %v1483 = vadd.f32 %v1481, 1.0
    %v1484 = vrcp.pop %v1482
    %v1485 = vmul.f32 1.0, %v1484
    %v1486 = vrcp.pop %v1483
    %v1487 = vmul.f32 1.0, %v1486
    %v1488 = vtanh.pop %v1475
    %v1489 = vmul.f32 %v1485, 0.0
    %1491 = vrot.lane.b32.xlu0 %v1488, 64
    %v1492 = vpop.permute.xlu0 %1491
    %v1494 = vmul.f32 %v1485, %v1492
    %1496 = vrot.lane.b32.xlu0 %v1494, 64
    %v1497 = vpop.permute.xlu0 %1496
    %v1499 = vadd.f32 %v1489, %v1497
    %v1500 = vtanh.pop %v1499
    %1502 = vrot.lane.b32.xlu0 %v1500, 64
    %v1503 = vpop.permute.xlu0 %1502
    %v1505 = vmul.f32 %v1487, %v1503
    %v1506 = vld [vmem:[%s397] sm:$0xf]
    %v1507 = vld [vmem:[%s399] sm:$0xf]
    %v1510 = vunpack.c.l.s4 1983009808
    %v1511 = vunpack.c.0.s8 %v1510
    %v1512 = vlaneseq
    %v1513 = vshrl.u32 %v1512, 7
    %v1514 = vsub.s32 %v1511, %v1513
    %v1515 = vrot.slane %v1506, %v1514
    %v1516 = vcombine.high %v1515, %v1515
    %v1521 = vunpack.c.l.s4 1983009808
    %v1522 = vunpack.c.0.s8 %v1521
    %v1523 = vlaneseq
    %v1524 = vshrl.u32 %v1523, 7
    %v1525 = vsub.s32 %v1522, %v1524
    %v1526 = vrot.slane %v1507, %v1525
    %v1527 = vcombine.high %v1526, %v1526
    %v1530 = vsel %vm108, %v1515, %v1526
    %v1531 = vsel %vm109, %v1516, %v1527
    %v1532 = vpack.c.bf16 %v1505, %v1505
    %v1534 = vsel %vm315, %v1532, 0
    %1536 = vmatprep.subr.bf16.mxu0 0
    %1537 = vmatpush1.bf16.msra.mxu0 0
    %1538 = vmatprep.subr.bf16.mxu0 0
    %1539 = vmatpush1.bf16.msra.mxu0 0
    %1540 = vmatprep.subr.bf16.mxu0 0
    %1541 = vmatpush1.bf16.msra.mxu0 0
    %1542 = vmatprep.subr.bf16.mxu0 0
    %1543 = vmatpush1.bf16.msra.mxu0 0
    %1544 = vmatprep.subr.bf16.mxu0 %v1424
    %1545 = vmatpush1.bf16.msra.mxu0 %v1423
    %1546 = vmatprep.subr.bf16.mxu0 %v1422
    %1547 = vmatpush1.bf16.msra.mxu0 %v1421
    %1548 = vmatprep.subr.bf16.mxu0 %v1420
    %1549 = vmatpush1.bf16.msra.mxu0 %v1419
    %1550 = vmatprep.subr.bf16.mxu0 %v1418
    %1551 = vmatpush1.bf16.msra.mxu0 %v1417
    %1552 = vmatprep.subr.bf16.mxu0 0
    %1553 = vmatpush2.bf16.msra.mxu0 0
    %1554 = vmatprep.subr.bf16.mxu0 0
    %1555 = vmatpush2.bf16.msra.mxu0 0
    %1556 = vmatprep.subr.bf16.mxu0 0
    %1557 = vmatpush2.bf16.msra.mxu0 0
    %1558 = vmatprep.subr.bf16.mxu0 0
    %1559 = vmatpush2.bf16.msra.mxu0 0
    %1560 = vmatprep.subr.bf16.mxu0 0
    %1561 = vmatpush2.bf16.msra.mxu0 0
    %1562 = vmatprep.subr.bf16.mxu0 0
    %1563 = vmatpush2.bf16.msra.mxu0 0
    %1564 = vmatprep.subr.bf16.mxu0 0
    %1565 = vmatpush2.bf16.msra.mxu0 0
    %1566 = vmatprep.subr.bf16.mxu0 0
    %1567 = vmatpush2.bf16.msra.mxu0 0
    %1568 = vmatprep.mubr.bf16.mxu0 0
    %1569 = vmatmul.mubr.bf16.gmra.mxu0 %v1534
    %v1570 = vpop.f32.mrf.mxu0
    %v1571 = vadd.f32 0.0, %v1570
    %v1572 = vpop.f32.mrf.mxu0
    %v1573 = vadd.f32 0.0, %v1572
    %v1574 = vpop.f32.mrf.mxu0
    %v1575 = vpop.f32.mrf.mxu0
    %1576 = vdwg.mxu0
    %v1577 = vadd.f32 %v1530, %v1571
    %v1578 = vadd.f32 %v1531, %v1573
    %v1579 = vxor.u32 %v1577, 2147483648
    %v1580 = vxor.u32 %v1578, 2147483648
    %v1581 = vmul.f32 %v1579, 1.442695
    %v1582 = vpow.pop %v1581
    %v1583 = vmul.f32 %v1580, 1.442695
    %v1584 = vpow.pop %v1583
    %v1585 = vadd.f32 %v1582, 1.0
    %v1586 = vadd.f32 %v1584, 1.0
    %v1587 = vrcp.pop %v1585
    %v1588 = vmul.f32 1.0, %v1587
    %v1589 = vrcp.pop %v1586
    %v1590 = vmul.f32 1.0, %v1589
    %v1591 = vtanh.pop %v1578
    %v1592 = vmul.f32 %v1588, %v1499
    %1594 = vrot.lane.b32.xlu0 %v1591, 64
    %v1595 = vpop.permute.xlu0 %1594
    %v1597 = vmul.f32 %v1588, %v1595
    %1599 = vrot.lane.b32.xlu0 %v1597, 64
    %v1600 = vpop.permute.xlu0 %1599
    %v1602 = vadd.f32 %v1592, %v1600
    %v1603 = vtanh.pop %v1602
    %1605 = vrot.lane.b32.xlu0 %v1603, 64
    %v1606 = vpop.permute.xlu0 %1605
    %v1608 = vmul.f32 %v1590, %v1606
    %v1609 = vld [vmem:[%s506] sm:$0xf]
    %v1610 = vld [vmem:[%s508] sm:$0xf]
    %v1613 = vunpack.c.l.s4 1983009808
    %v1614 = vunpack.c.0.s8 %v1613
    %v1615 = vlaneseq
    %v1616 = vshrl.u32 %v1615, 7
    %v1617 = vsub.s32 %v1614, %v1616
    %v1618 = vrot.slane %v1609, %v1617
    %v1619 = vcombine.high %v1618, %v1618
    %v1624 = vunpack.c.l.s4 1983009808
    %v1625 = vunpack.c.0.s8 %v1624
    %v1626 = vlaneseq
    %v1627 = vshrl.u32 %v1626, 7
    %v1628 = vsub.s32 %v1625, %v1627
    %v1629 = vrot.slane %v1610, %v1628
    %v1630 = vcombine.high %v1629, %v1629
    %v1633 = vsel %vm108, %v1618, %v1629
    %v1634 = vsel %vm109, %v1619, %v1630
    %v1635 = vpack.c.bf16 %v1608, %v1608
    %v1637 = vsel %vm315, %v1635, 0
    %1639 = vmatprep.subr.bf16.mxu0 0
    %1640 = vmatpush1.bf16.msra.mxu0 0
    %1641 = vmatprep.subr.bf16.mxu0 0
    %1642 = vmatpush1.bf16.msra.mxu0 0
    %1643 = vmatprep.subr.bf16.mxu0 0
    %1644 = vmatpush1.bf16.msra.mxu0 0
    %1645 = vmatprep.subr.bf16.mxu0 0
    %1646 = vmatpush1.bf16.msra.mxu0 0
    %1647 = vmatprep.subr.bf16.mxu0 %v1424
    %1648 = vmatpush1.bf16.msra.mxu0 %v1423
    %1649 = vmatprep.subr.bf16.mxu0 %v1422
    %1650 = vmatpush1.bf16.msra.mxu0 %v1421
    %1651 = vmatprep.subr.bf16.mxu0 %v1420
    %1652 = vmatpush1.bf16.msra.mxu0 %v1419
    %1653 = vmatprep.subr.bf16.mxu0 %v1418
    %1654 = vmatpush1.bf16.msra.mxu0 %v1417
    %1655 = vmatprep.subr.bf16.mxu0 0
    %1656 = vmatpush2.bf16.msra.mxu0 0
    %1657 = vmatprep.subr.bf16.mxu0 0
    %1658 = vmatpush2.bf16.msra.mxu0 0
    %1659 = vmatprep.subr.bf16.mxu0 0
    %1660 = vmatpush2.bf16.msra.mxu0 0
    %1661 = vmatprep.subr.bf16.mxu0 0
    %1662 = vmatpush2.bf16.msra.mxu0 0
    %1663 = vmatprep.subr.bf16.mxu0 0
    %1664 = vmatpush2.bf16.msra.mxu0 0
    %1665 = vmatprep.subr.bf16.mxu0 0
    %1666 = vmatpush2.bf16.msra.mxu0 0
    %1667 = vmatprep.subr.bf16.mxu0 0
    %1668 = vmatpush2.bf16.msra.mxu0 0
    %1669 = vmatprep.subr.bf16.mxu0 0
    %1670 = vmatpush2.bf16.msra.mxu0 0
    %1671 = vmatprep.mubr.bf16.mxu0 0
    %1672 = vmatmul.mubr.bf16.gmra.mxu0 %v1637
    %v1673 = vpop.f32.mrf.mxu0
    %v1674 = vadd.f32 0.0, %v1673
    %v1675 = vpop.f32.mrf.mxu0
    %v1676 = vadd.f32 0.0, %v1675
    %v1677 = vpop.f32.mrf.mxu0
    %v1678 = vpop.f32.mrf.mxu0
    %1679 = vdwg.mxu0
    %v1680 = vadd.f32 %v1633, %v1674
    %v1681 = vadd.f32 %v1634, %v1676
    %v1682 = vxor.u32 %v1680, 2147483648
    %v1683 = vxor.u32 %v1681, 2147483648
    %v1684 = vmul.f32 %v1682, 1.442695
    %v1685 = vpow.pop %v1684
    %v1686 = vmul.f32 %v1683, 1.442695
    %v1687 = vpow.pop %v1686
    %v1688 = vadd.f32 %v1685, 1.0
    %v1689 = vadd.f32 %v1687, 1.0
    %v1690 = vrcp.pop %v1688
    %v1691 = vmul.f32 1.0, %v1690
    %v1692 = vrcp.pop %v1689
    %v1693 = vmul.f32 1.0, %v1692
    %v1694 = vtanh.pop %v1681
    %v1695 = vmul.f32 %v1691, %v1602
    %1697 = vrot.lane.b32.xlu0 %v1694, 64
    %v1698 = vpop.permute.xlu0 %1697
    %v1700 = vmul.f32 %v1691, %v1698
    %1702 = vrot.lane.b32.xlu0 %v1700, 64
    %v1703 = vpop.permute.xlu0 %1702
    %v1705 = vadd.f32 %v1695, %v1703
    %v1706 = vtanh.pop %v1705
    %1708 = vrot.lane.b32.xlu0 %v1706, 64
    %v1709 = vpop.permute.xlu0 %1708
    %v1711 = vmul.f32 %v1693, %v1709
    %v1712 = vld [vmem:[%s615] sm:$0xf]
    %v1713 = vld [vmem:[%s617] sm:$0xf]
    %v1716 = vunpack.c.l.s4 1983009808
    %v1717 = vunpack.c.0.s8 %v1716
    %v1718 = vlaneseq
    %v1719 = vshrl.u32 %v1718, 7
    %v1720 = vsub.s32 %v1717, %v1719
    %v1721 = vrot.slane %v1712, %v1720
    %v1722 = vcombine.high %v1721, %v1721
    %v1727 = vunpack.c.l.s4 1983009808
    %v1728 = vunpack.c.0.s8 %v1727
    %v1729 = vlaneseq
    %v1730 = vshrl.u32 %v1729, 7
    %v1731 = vsub.s32 %v1728, %v1730
    %v1732 = vrot.slane %v1713, %v1731
    %v1733 = vcombine.high %v1732, %v1732
    %v1736 = vsel %vm108, %v1721, %v1732
    %v1737 = vsel %vm109, %v1722, %v1733
    %v1738 = vpack.c.bf16 %v1711, %v1711
    %v1740 = vsel %vm315, %v1738, 0
    %1742 = vmatprep.subr.bf16.mxu0 0
    %1743 = vmatpush1.bf16.msra.mxu0 0
    %1744 = vmatprep.subr.bf16.mxu0 0
    %1745 = vmatpush1.bf16.msra.mxu0 0
    %1746 = vmatprep.subr.bf16.mxu0 0
    %1747 = vmatpush1.bf16.msra.mxu0 0
    %1748 = vmatprep.subr.bf16.mxu0 0
    %1749 = vmatpush1.bf16.msra.mxu0 0
    %1750 = vmatprep.subr.bf16.mxu0 %v1424
    %1751 = vmatpush1.bf16.msra.mxu0 %v1423
    %1752 = vmatprep.subr.bf16.mxu0 %v1422
    %1753 = vmatpush1.bf16.msra.mxu0 %v1421
    %1754 = vmatprep.subr.bf16.mxu0 %v1420
    %1755 = vmatpush1.bf16.msra.mxu0 %v1419
    %1756 = vmatprep.subr.bf16.mxu0 %v1418
    %1757 = vmatpush1.bf16.msra.mxu0 %v1417
    %1758 = vmatprep.subr.bf16.mxu0 0
    %1759 = vmatpush2.bf16.msra.mxu0 0
    %1760 = vmatprep.subr.bf16.mxu0 0
    %1761 = vmatpush2.bf16.msra.mxu0 0
    %1762 = vmatprep.subr.bf16.mxu0 0
    %1763 = vmatpush2.bf16.msra.mxu0 0
    %1764 = vmatprep.subr.bf16.mxu0 0
    %1765 = vmatpush2.bf16.msra.mxu0 0
    %1766 = vmatprep.subr.bf16.mxu0 0
    %1767 = vmatpush2.bf16.msra.mxu0 0
    %1768 = vmatprep.subr.bf16.mxu0 0
    %1769 = vmatpush2.bf16.msra.mxu0 0
    %1770 = vmatprep.subr.bf16.mxu0 0
    %1771 = vmatpush2.bf16.msra.mxu0 0
    %1772 = vmatprep.subr.bf16.mxu0 0
    %1773 = vmatpush2.bf16.msra.mxu0 0
    %1774 = vmatprep.mubr.bf16.mxu0 0
    %1775 = vmatmul.mubr.bf16.gmra.mxu0 %v1740
    %v1776 = vpop.f32.mrf.mxu0
    %v1777 = vadd.f32 0.0, %v1776
    %v1778 = vpop.f32.mrf.mxu0
    %v1779 = vadd.f32 0.0, %v1778
    %v1780 = vpop.f32.mrf.mxu0
    %v1781 = vpop.f32.mrf.mxu0
    %1782 = vdwg.mxu0
    %v1783 = vadd.f32 %v1736, %v1777
    %v1784 = vadd.f32 %v1737, %v1779
    %v1785 = vxor.u32 %v1783, 2147483648
    %v1786 = vxor.u32 %v1784, 2147483648
    %v1787 = vmul.f32 %v1785, 1.442695
    %v1788 = vpow.pop %v1787
    %v1789 = vmul.f32 %v1786, 1.442695
    %v1790 = vpow.pop %v1789
    %v1791 = vadd.f32 %v1788, 1.0
    %v1792 = vadd.f32 %v1790, 1.0
    %v1793 = vrcp.pop %v1791
    %v1794 = vmul.f32 1.0, %v1793
    %v1795 = vrcp.pop %v1792
    %v1796 = vmul.f32 1.0, %v1795
    %v1797 = vtanh.pop %v1784
    %v1798 = vmul.f32 %v1794, %v1705
    %1800 = vrot.lane.b32.xlu0 %v1797, 64
    %v1801 = vpop.permute.xlu0 %1800
    %v1803 = vmul.f32 %v1794, %v1801
    %1805 = vrot.lane.b32.xlu0 %v1803, 64
    %v1806 = vpop.permute.xlu0 %1805
    %v1808 = vadd.f32 %v1798, %v1806
    %v1809 = vtanh.pop %v1808
    %1811 = vrot.lane.b32.xlu0 %v1809, 64
    %v1812 = vpop.permute.xlu0 %1811
    %v1814 = vmul.f32 %v1796, %v1812
    %v1815 = vsel %vm108, %v1732, %v1721
    %v1816 = vsel %vm109, %v1733, %v1722
    %v1817 = vpack.c.bf16 %v1814, %v1814
    %v1819 = vsel %vm315, %v1817, 0
    %1821 = vmatprep.subr.bf16.mxu0 0
    %1822 = vmatpush1.bf16.msra.mxu0 0
    %1823 = vmatprep.subr.bf16.mxu0 0
    %1824 = vmatpush1.bf16.msra.mxu0 0
    %1825 = vmatprep.subr.bf16.mxu0 0
    %1826 = vmatpush1.bf16.msra.mxu0 0
    %1827 = vmatprep.subr.bf16.mxu0 0
    %1828 = vmatpush1.bf16.msra.mxu0 0
    %1829 = vmatprep.subr.bf16.mxu0 %v1424
    %1830 = vmatpush1.bf16.msra.mxu0 %v1423
    %1831 = vmatprep.subr.bf16.mxu0 %v1422
    %1832 = vmatpush1.bf16.msra.mxu0 %v1421
    %1833 = vmatprep.subr.bf16.mxu0 %v1420
    %1834 = vmatpush1.bf16.msra.mxu0 %v1419
    %1835 = vmatprep.subr.bf16.mxu0 %v1418
    %1836 = vmatpush1.bf16.msra.mxu0 %v1417
    %1837 = vmatprep.subr.bf16.mxu0 0
    %1838 = vmatpush2.bf16.msra.mxu0 0
    %1839 = vmatprep.subr.bf16.mxu0 0
    %1840 = vmatpush2.bf16.msra.mxu0 0
    %1841 = vmatprep.subr.bf16.mxu0 0
    %1842 = vmatpush2.bf16.msra.mxu0 0
    %1843 = vmatprep.subr.bf16.mxu0 0
    %1844 = vmatpush2.bf16.msra.mxu0 0
    %1845 = vmatprep.subr.bf16.mxu0 0
    %1846 = vmatpush2.bf16.msra.mxu0 0
    %1847 = vmatprep.subr.bf16.mxu0 0
    %1848 = vmatpush2.bf16.msra.mxu0 0
    %1849 = vmatprep.subr.bf16.mxu0 0
    %1850 = vmatpush2.bf16.msra.mxu0 0
    %1851 = vmatprep.subr.bf16.mxu0 0
    %1852 = vmatpush2.bf16.msra.mxu0 0
    %1853 = vmatprep.mubr.bf16.mxu0 0
    %1854 = vmatmul.mubr.bf16.gmra.mxu0 %v1819
    %v1855 = vpop.f32.mrf.mxu0
    %v1856 = vadd.f32 0.0, %v1855
    %v1857 = vpop.f32.mrf.mxu0
    %v1858 = vadd.f32 0.0, %v1857
    %v1859 = vpop.f32.mrf.mxu0
    %v1860 = vpop.f32.mrf.mxu0
    %1861 = vdwg.mxu0
    %v1862 = vadd.f32 %v1815, %v1856
    %v1863 = vadd.f32 %v1816, %v1858
    %v1864 = vxor.u32 %v1862, 2147483648
    %v1865 = vxor.u32 %v1863, 2147483648
    %v1866 = vmul.f32 %v1864, 1.442695
    %v1867 = vpow.pop %v1866
    %v1868 = vmul.f32 %v1865, 1.442695
    %v1869 = vpow.pop %v1868
    %v1870 = vadd.f32 %v1867, 1.0
    %v1871 = vadd.f32 %v1869, 1.0
    %v1872 = vrcp.pop %v1870
    %v1873 = vmul.f32 1.0, %v1872
    %v1874 = vrcp.pop %v1871
    %v1875 = vmul.f32 1.0, %v1874
    %v1876 = vtanh.pop %v1863
    %v1877 = vmul.f32 %v1873, %v1808
    %1879 = vrot.lane.b32.xlu0 %v1876, 64
    %v1880 = vpop.permute.xlu0 %1879
    %v1882 = vmul.f32 %v1873, %v1880
    %1884 = vrot.lane.b32.xlu0 %v1882, 64
    %v1885 = vpop.permute.xlu0 %1884
    %v1887 = vadd.f32 %v1877, %v1885
    %v1888 = vtanh.pop %v1887
    %1890 = vrot.lane.b32.xlu0 %v1888, 64
    %v1891 = vpop.permute.xlu0 %1890
    %v1893 = vmul.f32 %v1875, %v1891
    %vm1894 = vcmask 261120
    %v1895 = vsel %vm1894, %v1893, %v1814
    %v1896 = vpack.c.bf16 %v1895, %v1895
    %v1897 = vld [vmem:[%s7] sm:$0xf]
    %v1898 = vld [vmem:[%s7 + $0x4] sm:$0xf]
    %v1899 = vld [vmem:[%s7 + $0x8] sm:$0xf]
    %v1900 = vld [vmem:[%s7 + $0xc] sm:$0xf]
    %v1901 = vld [vmem:[%s7 + $0x10] sm:$0xf]
    %v1902 = vld [vmem:[%s7 + $0x14] sm:$0xf]
    %v1903 = vld [vmem:[%s7 + $0x18] sm:$0xf]
    %v1904 = vld [vmem:[%s7 + $0x1c] sm:$0xf]
    %v1905 = vld [vmem:[%s8] sm:$0x1]
    %v1907 = vlaneseq
    %v1908 = vshrl.u32 %v1907, 7
    %v1909 = vsub.s32 0, %v1908
    %v1910 = vrot.slane %v1905, %v1909
    %v1920 = vunpack.c.l.b16 %v1897
    %v1921 = vunpack.c.l.b16 %v1898
    %v1922 = vunpack.c.l.b16 %v1899
    %v1923 = vunpack.c.l.b16 %v1900
    %v1924 = vunpack.c.l.b16 %v1901
    %v1925 = vunpack.c.l.b16 %v1902
    %v1926 = vunpack.c.l.b16 %v1903
    %v1927 = vunpack.c.l.b16 %v1904
    %v1928 = vpack.c.b16 %v1921, %v1920
    %v1929 = vpack.c.b16 %v1923, %v1922
    %v1930 = vpack.c.b16 %v1925, %v1924
    %v1931 = vpack.c.b16 %v1927, %v1926
    %v1937 = vsel %vm315, %v1896, 0
    %1939 = vmatprep.subr.bf16.mxu0 0
    %1940 = vmatpush1.bf16.msra.mxu0 0
    %1941 = vmatprep.subr.bf16.mxu0 0
    %1942 = vmatpush1.bf16.msra.mxu0 0
    %1943 = vmatprep.subr.bf16.mxu0 0
    %1944 = vmatpush1.bf16.msra.mxu0 0
    %1945 = vmatprep.subr.bf16.mxu0 0
    %1946 = vmatpush1.bf16.msra.mxu0 0
    %1947 = vmatprep.subr.bf16.mxu0 0
    %1948 = vmatpush1.bf16.msra.mxu0 %v1931
    %1949 = vmatprep.subr.bf16.mxu0 0
    %1950 = vmatpush1.bf16.msra.mxu0 %v1930
    %1951 = vmatprep.subr.bf16.mxu0 0
    %1952 = vmatpush1.bf16.msra.mxu0 %v1929
    %1953 = vmatprep.subr.bf16.mxu0 0
    %1954 = vmatpush1.bf16.msra.mxu0 %v1928
    %1955 = vmatprep.subr.bf16.mxu0 0
    %1956 = vmatpush2.bf16.msra.mxu0 0
    %1957 = vmatprep.subr.bf16.mxu0 0
    %1958 = vmatpush2.bf16.msra.mxu0 0
    %1959 = vmatprep.subr.bf16.mxu0 0
    %1960 = vmatpush2.bf16.msra.mxu0 0
    %1961 = vmatprep.subr.bf16.mxu0 0
    %1962 = vmatpush2.bf16.msra.mxu0 0
    %1963 = vmatprep.subr.bf16.mxu0 0
    %1964 = vmatpush2.bf16.msra.mxu0 0
    %1965 = vmatprep.subr.bf16.mxu0 0
    %1966 = vmatpush2.bf16.msra.mxu0 0
    %1967 = vmatprep.subr.bf16.mxu0 0
    %1968 = vmatpush2.bf16.msra.mxu0 0
    %1969 = vmatprep.subr.bf16.mxu0 0
    %1970 = vmatpush2.bf16.msra.mxu0 0
    %1971 = vmatprep.mubr.bf16.mxu0 0
    %1972 = vmatmul.mubr.bf16.gmra.mxu0 %v1937
    %v1973 = vpop.f32.mrf.mxu0
    %v1974 = vadd.f32 %v1910, %v1973
    %v1975 = vpop.f32.mrf.mxu0
    %v1976 = vpop.f32.mrf.mxu0
    %v1977 = vpop.f32.mrf.mxu0
    %1978 = vdwg.mxu0
    %v1979 = vmax.f32 %v1974, 0.0
    %v1980 = vpack.c.bf16 %v1979, %v1979
    %v1981 = vld [vmem:[%s9] sm:$0xf]
    %v1982 = vld [vmem:[%s9 + $0x4] sm:$0x1]
    %v1983 = vld [vmem:[%s10] sm:$0x1]
    %v1985 = vlaneseq
    %v1986 = vshrl.u32 %v1985, 7
    %v1987 = vsub.s32 0, %v1986
    %v1988 = vrot.slane %v1983, %v1987
    %v1992 = vunpack.c.l.b16 %v1981
    %v1993 = vunpack.c.l.b16 %v1982
    %v1994 = vpack.c.b16 %v1993, %v1992
    %vm1995 = vcmask 80896
    %v1997 = vsel %vm1995, %v1980, 0
    %vm1999 = vcmask 1044480
    %v2001 = vsel %vm1999, %v1994, 0
    %2003 = vmatprep.subr.bf16.mxu0 0
    %2004 = vmatpush1.bf16.msra.mxu0 0
    %2005 = vmatprep.subr.bf16.mxu0 0
    %2006 = vmatpush1.bf16.msra.mxu0 0
    %2007 = vmatprep.subr.bf16.mxu0 0
    %2008 = vmatpush1.bf16.msra.mxu0 0
    %2009 = vmatprep.subr.bf16.mxu0 0
    %2010 = vmatpush1.bf16.msra.mxu0 0
    %2011 = vmatprep.subr.bf16.mxu0 0
    %2012 = vmatpush1.bf16.msra.mxu0 0
    %2013 = vmatprep.subr.bf16.mxu0 0
    %2014 = vmatpush1.bf16.msra.mxu0 0
    %2015 = vmatprep.subr.bf16.mxu0 0
    %2016 = vmatpush1.bf16.msra.mxu0 0
    %2017 = vmatprep.subr.bf16.mxu0 0
    %2018 = vmatpush1.bf16.msra.mxu0 %v2001
    %2019 = vmatprep.subr.bf16.mxu0 0
    %2020 = vmatpush2.bf16.msra.mxu0 0
    %2021 = vmatprep.subr.bf16.mxu0 0
    %2022 = vmatpush2.bf16.msra.mxu0 0
    %2023 = vmatprep.subr.bf16.mxu0 0
    %2024 = vmatpush2.bf16.msra.mxu0 0
    %2025 = vmatprep.subr.bf16.mxu0 0
    %2026 = vmatpush2.bf16.msra.mxu0 0
    %2027 = vmatprep.subr.bf16.mxu0 0
    %2028 = vmatpush2.bf16.msra.mxu0 0
    %2029 = vmatprep.subr.bf16.mxu0 0
    %2030 = vmatpush2.bf16.msra.mxu0 0
    %2031 = vmatprep.subr.bf16.mxu0 0
    %2032 = vmatpush2.bf16.msra.mxu0 0
    %2033 = vmatprep.subr.bf16.mxu0 0
    %2034 = vmatpush2.bf16.msra.mxu0 0
    %2035 = vmatprep.mubr.bf16.mxu0 0
    %2036 = vmatmul.mubr.bf16.gmra.mxu0 %v1997
    %v2037 = vpop.f32.mrf.mxu0
    %v2038 = vadd.f32 %v1988, %v2037
    %v2039 = vpop.f32.mrf.mxu0
    %v2040 = vpop.f32.mrf.mxu0
    %v2041 = vpop.f32.mrf.mxu0
    %2042 = vdwg.mxu0
    %v2043 = vxor.u32 %v2038, 2147483648
    %v2044 = vmul.f32 %v2043, 1.442695
    %v2045 = vpow.pop %v2044
    %v2046 = vadd.f32 %v2045, 1.0
    %v2047 = vrcp.pop %v2046
    %v2048 = vmul.f32 1.0, %v2047
    %vm2049 = vcmask 25600
    %2050 = vst.msk [vmem:[#allocation10] sm:$0x3] %vm2049, %v2048
    // Predicated region
    $region58: #{tpu_custom_call.1} parent=1 // pred_check
      _
    $region59: #{tpu_custom_call.1} parent=1 // pred_check_branch
      %2052 = sbr.rel (0) target = $region61
    $region60: #{tpu_custom_call.1} parent=1 // pred_region
      %s2054 = ssub.s32 32, 32
      %2055 = vsyncadd [#allocation6], %s2054
      %s2057 = sshll.u32 [#allocation10], 4
      %s2058 = int_to_ptr.vmem [resolvable:$true] %s2057
      %2060 = dma.vmem_to_hbm [thread:$0]  %s2058, 32, %s11, [#allocation6]
    $region61: #{tpu_custom_call.1} parent=1 // pred_fallthru
      _
    // Predicated region
    $region62: #{tpu_custom_call.1} parent=1 // pred_check
      _
    $region63: #{tpu_custom_call.1} parent=1 // pred_check_branch
      %2062 = sbr.rel (0) target = $region65
    $region64: #{tpu_custom_call.1} parent=1 // pred_region
      %2063 = dma.done [#allocation6], 32
    $region65: #{tpu_custom_call.1} parent=1 // pred_fallthru
      _
    %2064 = vsyncpa [#allocation5], 1
    %2065 = vsyncpa [#allocation8], 1
    %2066 = vsyncpa [#allocation6], 1

</llo_original>
